<compile_context>
chip_gen: v6e
topology: v6e:2x2x1
jax: 0.10.0
libtpu: 0.0.40
codegen_flags: <defaults>
</compile_context>

<pallas_src>
import jax
import jax.numpy as jnp
from jax.experimental import pallas as pl
from jax.experimental.pallas import tpu as pltpu


# ----------------------------------------------------------------------------
# Kernel
# ----------------------------------------------------------------------------
def _discriminator_kernel(h_ref, r_ref, t_ref,
                          w1h_ref, w1r_ref, w1t_ref, g1_ref, be1_ref,
                          w2_ref, g2_ref, be2_ref,
                          w3_ref, b3_ref,
                          wo_ref, wsh_ref, wsr_ref, wst_ref,
                          bias_ref,
                          out_ref):
    eps = jnp.float32(1e-5)
    slope = jnp.float32(0.2)
    bf16 = jnp.bfloat16
    f32 = jnp.float32

    h = h_ref[...]                       # [B, E] f32
    r = r_ref[...]
    t = t_ref[...]

    def leaky(v):
        return jnp.where(v >= 0, v, slope * v)

    def bn_fold(v, gamma, beta):
        # Training-mode BN folded into one scale/shift pass.
        # var computed single-pass as E[x^2] - mu^2 (clamped for fp safety).
        mu = jnp.mean(v, axis=0, keepdims=True)
        msq = jnp.mean(v * v, axis=0, keepdims=True)
        var = jnp.maximum(msq - mu * mu, 0.0)
        scale = gamma * jax.lax.rsqrt(var + eps)
        shift = beta - mu * scale
        return v * scale + shift

    # fc1 (bias cancelled by BN) -> bn1 -> LeakyReLU(0.2) -> dropout(identity)
    # Concat is fused: x @ W1 == h @ W1[:E] + r @ W1[E:2E] + t @ W1[2E:].
    h1 = (jnp.dot(h.astype(bf16), w1h_ref[...], preferred_element_type=f32)
          + jnp.dot(r.astype(bf16), w1r_ref[...], preferred_element_type=f32)
          + jnp.dot(t.astype(bf16), w1t_ref[...], preferred_element_type=f32))
    a1 = leaky(bn_fold(h1, g1_ref[...], be1_ref[...]))

    # fc2 (bias cancelled by BN) -> bn2 -> LeakyReLU -> dropout(identity) -> residual
    h2 = jnp.dot(a1.astype(bf16), w2_ref[...], preferred_element_type=f32)
    a2 = leaky(bn_fold(h2, g2_ref[...], be2_ref[...]))
    res = a2 + a1

    # fc3 (+bias) -> LeakyReLU -> dropout(identity); output features zero-padded to 128
    h3 = jnp.dot(res.astype(bf16), w3_ref[...], preferred_element_type=f32) + b3_ref[...]
    a3 = leaky(h3)

    # fc_out head and skip head as VPU multiply + lane reduction (no N=1 matmuls).
    out = jnp.sum(a3 * wo_ref[...], axis=-1, keepdims=True)
    skip = jnp.sum(h * wsh_ref[...] + r * wsr_ref[...] + t * wst_ref[...],
                   axis=-1, keepdims=True)

    out_ref[...] = out + skip + bias_ref[0]          # [B, 1]


# ----------------------------------------------------------------------------
# Parameter init (deterministic, mirrors kaiming_uniform_(a=0.2, fan_in))
# PyTorch-layout params: weights [out, in].
# ----------------------------------------------------------------------------
def _kaiming_uniform(key, out_f, in_f, a=0.2):
    gain = (2.0 / (1.0 + a * a)) ** 0.5
    bound = gain * (3.0 / in_f) ** 0.5
    return jax.random.uniform(key, (out_f, in_f), jnp.float32, -bound, bound)


def init_discriminator_params(key, embed_dim=32, hidden_dim=128):
    in_features = embed_dim * 3
    ks = jax.random.split(key, 5)
    return {
        "w1": _kaiming_uniform(ks[0], hidden_dim, in_features),
        "b1": jnp.zeros((hidden_dim,), jnp.float32),   # cancelled by bn1 (kept for fidelity)
        "g1": jnp.ones((hidden_dim,), jnp.float32),
        "be1": jnp.zeros((hidden_dim,), jnp.float32),
        "w2": _kaiming_uniform(ks[1], hidden_dim, hidden_dim),
        "b2": jnp.zeros((hidden_dim,), jnp.float32),   # cancelled by bn2 (kept for fidelity)
        "g2": jnp.ones((hidden_dim,), jnp.float32),
        "be2": jnp.zeros((hidden_dim,), jnp.float32),
        "w3": _kaiming_uniform(ks[2], in_features, hidden_dim),
        "b3": jnp.zeros((in_features,), jnp.float32),
        "wo": _kaiming_uniform(ks[3], 1, in_features),
        "bo": jnp.zeros((1,), jnp.float32),
        "ws": _kaiming_uniform(ks[4], 1, in_features),
        "bs": jnp.zeros((1,), jnp.float32),
    }


# ----------------------------------------------------------------------------
# One-time parameter preparation (transpose / split / pad / bf16 cast).
# Done OUTSIDE the hot path so the forward wrapper emits zero weight-layout ops.
# ----------------------------------------------------------------------------
def prepare_kernel_params(params, embed_dim):
    E = embed_dim
    in_f = 3 * E
    in_pad = ((in_f + 127) // 128) * 128      # pad fc3/fc_out feature dim to lane width

    def pad_last(a, n):
        return jnp.pad(a, ((0, 0), (0, n - a.shape[-1])))

    row = lambda v: v.reshape(1, -1)

    w1 = params["w1"].T.astype(jnp.bfloat16)                   # [3E, H]
    w2 = params["w2"].T.astype(jnp.bfloat16)                   # [H,  H]
    w3 = pad_last(params["w3"].T, in_pad).astype(jnp.bfloat16)  # [H, in_pad]
    b3 = pad_last(row(params["b3"]), in_pad)                    # [1, in_pad] f32
    wo = pad_last(params["wo"].astype(jnp.float32), in_pad)     # [1, in_pad] f32
    ws = params["ws"].astype(jnp.float32)                       # [1, 3E]

    return {
        "w1h": w1[:E], "w1r": w1[E:2 * E], "w1t": w1[2 * E:],
        "g1": row(params["g1"]), "be1": row(params["be1"]),
        "w2": w2,
        "g2": row(params["g2"]), "be2": row(params["be2"]),
        "w3": w3, "b3": b3,
        "wo": wo,
        "wsh": ws[:, :E], "wsr": ws[:, E:2 * E], "wst": ws[:, 2 * E:],
        # (bo + bs) folded into a single SMEM scalar
        "bias": (params["bo"] + params["bs"]).reshape(1,).astype(jnp.float32),
    }


# ----------------------------------------------------------------------------
# Forward wrapper
# ----------------------------------------------------------------------------
def discriminator_forward(kparams, head_emb, rel_emb, tail_emb):
    # Embeddings are [B, embed_dim] (the torch.cat(..., -1) is fused into the kernel).
    # TODO(synk): >2-D embedding inputs (interleaved flatten) not supported by the
    # fused-concat formulation; pass 2-D [B, E] embeddings.
    h = head_emb.astype(jnp.float32)
    r = rel_emb.astype(jnp.float32)
    t = tail_emb.astype(jnp.float32)
    assert h.ndim == 2 and r.ndim == 2 and t.ndim == 2

    B = h.shape[0]

    vmem = pl.BlockSpec(memory_space=pltpu.MemorySpace.VMEM)
    smem = pl.BlockSpec(memory_space=pltpu.MemorySpace.SMEM)

    args = (
        h, r, t,
        kparams["w1h"], kparams["w1r"], kparams["w1t"],
        kparams["g1"], kparams["be1"],
        kparams["w2"], kparams["g2"], kparams["be2"],
        kparams["w3"], kparams["b3"],
        kparams["wo"], kparams["wsh"], kparams["wsr"], kparams["wst"],
        kparams["bias"],
    )
    in_specs = [vmem] * (len(args) - 1) + [smem]

    out = pl.pallas_call(
        _discriminator_kernel,
        out_shape=jax.ShapeDtypeStruct((B, 1), jnp.float32),
        in_specs=in_specs,
        out_specs=vmem,
    )(*args)

    return out.reshape(-1)   # .view(-1)


# ----------------------------------------------------------------------------
# Main
# ----------------------------------------------------------------------------
if __name__ == "__main__":
    embed_dim = 32
    hidden_dim = 128
    batch = 128          # fill the MXU M dimension (per perf review)

    key = jax.random.PRNGKey(0)
    k_param, k_h, k_r, k_t = jax.random.split(key, 4)

    params = init_discriminator_params(k_param, embed_dim=embed_dim, hidden_dim=hidden_dim)
    kparams = prepare_kernel_params(params, embed_dim)   # one-time layout prep

    head_emb = jax.random.normal(k_h, (batch, embed_dim), jnp.float32)
    rel_emb = jax.random.normal(k_r, (batch, embed_dim), jnp.float32)
    tail_emb = jax.random.normal(k_t, (batch, embed_dim), jnp.float32)

    fwd = jax.jit(discriminator_forward)
    out = fwd(kparams, head_emb, rel_emb, tail_emb)
    jax.block_until_ready(out)

    assert out.shape == (batch,), out.shape
    assert out.dtype == jnp.float32, out.dtype
    assert bool(jnp.all(jnp.isfinite(out)))
    print("KERNEL_OK")
</pallas_src>

<mosaic_0001>
module attributes {stable_mosaic.version = 11 : i64} {
  func.func @_discriminator_kernel(%arg0: memref<128x32xf32, #tpu.memory_space<vmem>>, %arg1: memref<128x32xf32, #tpu.memory_space<vmem>>, %arg2: memref<128x32xf32, #tpu.memory_space<vmem>>, %arg3: memref<32x128xbf16, #tpu.memory_space<vmem>>, %arg4: memref<32x128xbf16, #tpu.memory_space<vmem>>, %arg5: memref<32x128xbf16, #tpu.memory_space<vmem>>, %arg6: memref<1x128xf32, #tpu.memory_space<vmem>>, %arg7: memref<1x128xf32, #tpu.memory_space<vmem>>, %arg8: memref<128x128xbf16, #tpu.memory_space<vmem>>, %arg9: memref<1x128xf32, #tpu.memory_space<vmem>>, %arg10: memref<1x128xf32, #tpu.memory_space<vmem>>, %arg11: memref<128x128xbf16, #tpu.memory_space<vmem>>, %arg12: memref<1x128xf32, #tpu.memory_space<vmem>>, %arg13: memref<1x128xf32, #tpu.memory_space<vmem>>, %arg14: memref<1x32xf32, #tpu.memory_space<vmem>>, %arg15: memref<1x32xf32, #tpu.memory_space<vmem>>, %arg16: memref<1x32xf32, #tpu.memory_space<vmem>>, %arg17: memref<1xf32, #tpu.memory_space<smem>>, %arg18: memref<128x1xf32, #tpu.memory_space<vmem>>) attributes {dimension_semantics = [], scalar_prefetch = 0 : i64, scratch_operands = 0 : i64, tpu.core_type = #tpu.core_type<tc>} {
    %c0 = arith.constant 0 : index
    %c0_0 = arith.constant 0 : index
    %0 = vector.load %arg0[%c0, %c0_0] : memref<128x32xf32, #tpu.memory_space<vmem>>, vector<128x32xf32>
    %c0_1 = arith.constant 0 : index
    %c0_2 = arith.constant 0 : index
    %1 = vector.load %arg1[%c0_1, %c0_2] : memref<128x32xf32, #tpu.memory_space<vmem>>, vector<128x32xf32>
    %c0_3 = arith.constant 0 : index
    %c0_4 = arith.constant 0 : index
    %2 = vector.load %arg2[%c0_3, %c0_4] : memref<128x32xf32, #tpu.memory_space<vmem>>, vector<128x32xf32>
    %3 = arith.truncf %0 : vector<128x32xf32> to vector<128x32xbf16>
    %c0_5 = arith.constant 0 : index
    %c0_6 = arith.constant 0 : index
    %4 = vector.load %arg3[%c0_5, %c0_6] : memref<32x128xbf16, #tpu.memory_space<vmem>>, vector<32x128xbf16>
    %cst = arith.constant dense<0.000000e+00> : vector<128x128xf32>
    %5 = tpu.matmul %3, %4, %cst {dimension_numbers = #tpu.dot_dimension_numbers<[1], [0], [0], [1], [0, 0, 1, 1], [], []>} : vector<128x32xbf16>, vector<32x128xbf16>, vector<128x128xf32> -> vector<128x128xf32>
    %6 = arith.truncf %1 : vector<128x32xf32> to vector<128x32xbf16>
    %c0_7 = arith.constant 0 : index
    %c0_8 = arith.constant 0 : index
    %7 = vector.load %arg4[%c0_7, %c0_8] : memref<32x128xbf16, #tpu.memory_space<vmem>>, vector<32x128xbf16>
    %cst_9 = arith.constant dense<0.000000e+00> : vector<128x128xf32>
    %8 = tpu.matmul %6, %7, %cst_9 {dimension_numbers = #tpu.dot_dimension_numbers<[1], [0], [0], [1], [0, 0, 1, 1], [], []>} : vector<128x32xbf16>, vector<32x128xbf16>, vector<128x128xf32> -> vector<128x128xf32>
    %9 = arith.addf %5, %8 : vector<128x128xf32>
    %10 = arith.truncf %2 : vector<128x32xf32> to vector<128x32xbf16>
    %c0_10 = arith.constant 0 : index
    %c0_11 = arith.constant 0 : index
    %11 = vector.load %arg5[%c0_10, %c0_11] : memref<32x128xbf16, #tpu.memory_space<vmem>>, vector<32x128xbf16>
    %cst_12 = arith.constant dense<0.000000e+00> : vector<128x128xf32>
    %12 = tpu.matmul %10, %11, %cst_12 {dimension_numbers = #tpu.dot_dimension_numbers<[1], [0], [0], [1], [0, 0, 1, 1], [], []>} : vector<128x32xbf16>, vector<32x128xbf16>, vector<128x128xf32> -> vector<128x128xf32>
    %13 = arith.addf %9, %12 : vector<128x128xf32>
    %c0_13 = arith.constant 0 : index
    %c0_14 = arith.constant 0 : index
    %14 = vector.load %arg6[%c0_13, %c0_14] : memref<1x128xf32, #tpu.memory_space<vmem>>, vector<1x128xf32>
    %c0_15 = arith.constant 0 : index
    %c0_16 = arith.constant 0 : index
    %15 = vector.load %arg7[%c0_15, %c0_16] : memref<1x128xf32, #tpu.memory_space<vmem>>, vector<1x128xf32>
    %cst_17 = arith.constant dense<0.000000e+00> : vector<128xf32>
    %16 = vector.multi_reduction <add>, %13, %cst_17 [0] : vector<128x128xf32> to vector<128xf32>
    %17 = vector.shape_cast %16 : vector<128xf32> to vector<1x128xf32>
    %cst_18 = arith.constant 1.280000e+02 : f32
    %18 = vector.broadcast %cst_18 : f32 to vector<1x128xf32>
    %19 = arith.divf %17, %18 : vector<1x128xf32>
    %20 = arith.mulf %13, %13 : vector<128x128xf32>
    %cst_19 = arith.constant dense<0.000000e+00> : vector<128xf32>
    %21 = vector.multi_reduction <add>, %20, %cst_19 [0] : vector<128x128xf32> to vector<128xf32>
    %22 = vector.shape_cast %21 : vector<128xf32> to vector<1x128xf32>
    %cst_20 = arith.constant 1.280000e+02 : f32
    %23 = vector.broadcast %cst_20 : f32 to vector<1x128xf32>
    %24 = arith.divf %22, %23 : vector<1x128xf32>
    %25 = arith.mulf %19, %19 : vector<1x128xf32>
    %26 = arith.subf %24, %25 : vector<1x128xf32>
    %cst_21 = arith.constant 0.000000e+00 : f32
    %27 = vector.broadcast %cst_21 : f32 to vector<1x128xf32>
    %28 = arith.maximumf %26, %27 : vector<1x128xf32>
    %cst_22 = arith.constant 9.99999974E-6 : f32
    %29 = vector.broadcast %cst_22 : f32 to vector<1x128xf32>
    %30 = arith.addf %28, %29 : vector<1x128xf32>
    %31 = math.rsqrt %30 : vector<1x128xf32>
    %32 = arith.mulf %14, %31 : vector<1x128xf32>
    %33 = arith.mulf %19, %32 : vector<1x128xf32>
    %34 = arith.subf %15, %33 : vector<1x128xf32>
    %35 = vector.broadcast %32 : vector<1x128xf32> to vector<128x128xf32>
    %36 = arith.mulf %13, %35 : vector<128x128xf32>
    %37 = vector.broadcast %34 : vector<1x128xf32> to vector<128x128xf32>
    %38 = arith.addf %36, %37 : vector<128x128xf32>
    %cst_23 = arith.constant 0.000000e+00 : f32
    %39 = vector.broadcast %cst_23 : f32 to vector<128x128xf32>
    %40 = arith.cmpf oge, %38, %39 : vector<128x128xf32>
    %cst_24 = arith.constant 2.000000e-01 : f32
    %41 = vector.broadcast %cst_24 : f32 to vector<128x128xf32>
    %42 = arith.mulf %41, %38 : vector<128x128xf32>
    %43 = arith.select %40, %38, %42 : vector<128x128xi1>, vector<128x128xf32>
    %44 = arith.truncf %43 : vector<128x128xf32> to vector<128x128xbf16>
    %c0_25 = arith.constant 0 : index
    %c0_26 = arith.constant 0 : index
    %45 = vector.load %arg8[%c0_25, %c0_26] : memref<128x128xbf16, #tpu.memory_space<vmem>>, vector<128x128xbf16>
    %cst_27 = arith.constant dense<0.000000e+00> : vector<128x128xf32>
    %46 = tpu.matmul %44, %45, %cst_27 {dimension_numbers = #tpu.dot_dimension_numbers<[1], [0], [0], [1], [0, 0, 1, 1], [], []>} : vector<128x128xbf16>, vector<128x128xbf16>, vector<128x128xf32> -> vector<128x128xf32>
    %c0_28 = arith.constant 0 : index
    %c0_29 = arith.constant 0 : index
    %47 = vector.load %arg9[%c0_28, %c0_29] : memref<1x128xf32, #tpu.memory_space<vmem>>, vector<1x128xf32>
    %c0_30 = arith.constant 0 : index
    %c0_31 = arith.constant 0 : index
    %48 = vector.load %arg10[%c0_30, %c0_31] : memref<1x128xf32, #tpu.memory_space<vmem>>, vector<1x128xf32>
    %cst_32 = arith.constant dense<0.000000e+00> : vector<128xf32>
    %49 = vector.multi_reduction <add>, %46, %cst_32 [0] : vector<128x128xf32> to vector<128xf32>
    %50 = vector.shape_cast %49 : vector<128xf32> to vector<1x128xf32>
    %cst_33 = arith.constant 1.280000e+02 : f32
    %51 = vector.broadcast %cst_33 : f32 to vector<1x128xf32>
    %52 = arith.divf %50, %51 : vector<1x128xf32>
    %53 = arith.mulf %46, %46 : vector<128x128xf32>
    %cst_34 = arith.constant dense<0.000000e+00> : vector<128xf32>
    %54 = vector.multi_reduction <add>, %53, %cst_34 [0] : vector<128x128xf32> to vector<128xf32>
    %55 = vector.shape_cast %54 : vector<128xf32> to vector<1x128xf32>
    %cst_35 = arith.constant 1.280000e+02 : f32
    %56 = vector.broadcast %cst_35 : f32 to vector<1x128xf32>
    %57 = arith.divf %55, %56 : vector<1x128xf32>
    %58 = arith.mulf %52, %52 : vector<1x128xf32>
    %59 = arith.subf %57, %58 : vector<1x128xf32>
    %cst_36 = arith.constant 0.000000e+00 : f32
    %60 = vector.broadcast %cst_36 : f32 to vector<1x128xf32>
    %61 = arith.maximumf %59, %60 : vector<1x128xf32>
    %cst_37 = arith.constant 9.99999974E-6 : f32
    %62 = vector.broadcast %cst_37 : f32 to vector<1x128xf32>
    %63 = arith.addf %61, %62 : vector<1x128xf32>
    %64 = math.rsqrt %63 : vector<1x128xf32>
    %65 = arith.mulf %47, %64 : vector<1x128xf32>
    %66 = arith.mulf %52, %65 : vector<1x128xf32>
    %67 = arith.subf %48, %66 : vector<1x128xf32>
    %68 = vector.broadcast %65 : vector<1x128xf32> to vector<128x128xf32>
    %69 = arith.mulf %46, %68 : vector<128x128xf32>
    %70 = vector.broadcast %67 : vector<1x128xf32> to vector<128x128xf32>
    %71 = arith.addf %69, %70 : vector<128x128xf32>
    %cst_38 = arith.constant 0.000000e+00 : f32
    %72 = vector.broadcast %cst_38 : f32 to vector<128x128xf32>
    %73 = arith.cmpf oge, %71, %72 : vector<128x128xf32>
    %cst_39 = arith.constant 2.000000e-01 : f32
    %74 = vector.broadcast %cst_39 : f32 to vector<128x128xf32>
    %75 = arith.mulf %74, %71 : vector<128x128xf32>
    %76 = arith.select %73, %71, %75 : vector<128x128xi1>, vector<128x128xf32>
    %77 = arith.addf %76, %43 : vector<128x128xf32>
    %78 = arith.truncf %77 : vector<128x128xf32> to vector<128x128xbf16>
    %c0_40 = arith.constant 0 : index
    %c0_41 = arith.constant 0 : index
    %79 = vector.load %arg11[%c0_40, %c0_41] : memref<128x128xbf16, #tpu.memory_space<vmem>>, vector<128x128xbf16>
    %cst_42 = arith.constant dense<0.000000e+00> : vector<128x128xf32>
    %80 = tpu.matmul %78, %79, %cst_42 {dimension_numbers = #tpu.dot_dimension_numbers<[1], [0], [0], [1], [0, 0, 1, 1], [], []>} : vector<128x128xbf16>, vector<128x128xbf16>, vector<128x128xf32> -> vector<128x128xf32>
    %c0_43 = arith.constant 0 : index
    %c0_44 = arith.constant 0 : index
    %81 = vector.load %arg12[%c0_43, %c0_44] : memref<1x128xf32, #tpu.memory_space<vmem>>, vector<1x128xf32>
    %82 = vector.broadcast %81 : vector<1x128xf32> to vector<128x128xf32>
    %83 = arith.addf %80, %82 : vector<128x128xf32>
    %cst_45 = arith.constant 0.000000e+00 : f32
    %84 = vector.broadcast %cst_45 : f32 to vector<128x128xf32>
    %85 = arith.cmpf oge, %83, %84 : vector<128x128xf32>
    %cst_46 = arith.constant 2.000000e-01 : f32
    %86 = vector.broadcast %cst_46 : f32 to vector<128x128xf32>
    %87 = arith.mulf %86, %83 : vector<128x128xf32>
    %88 = arith.select %85, %83, %87 : vector<128x128xi1>, vector<128x128xf32>
    %c0_47 = arith.constant 0 : index
    %c0_48 = arith.constant 0 : index
    %89 = vector.load %arg13[%c0_47, %c0_48] : memref<1x128xf32, #tpu.memory_space<vmem>>, vector<1x128xf32>
    %90 = vector.broadcast %89 : vector<1x128xf32> to vector<128x128xf32>
    %91 = arith.mulf %88, %90 : vector<128x128xf32>
    %cst_49 = arith.constant dense<0.000000e+00> : vector<128xf32>
    %92 = vector.multi_reduction <add>, %91, %cst_49 [1] : vector<128x128xf32> to vector<128xf32>
    %93 = vector.shape_cast %92 : vector<128xf32> to vector<128x1xf32>
    %c0_50 = arith.constant 0 : index
    %c0_51 = arith.constant 0 : index
    %94 = vector.load %arg14[%c0_50, %c0_51] : memref<1x32xf32, #tpu.memory_space<vmem>>, vector<1x32xf32>
    %95 = vector.broadcast %94 : vector<1x32xf32> to vector<128x32xf32>
    %96 = arith.mulf %0, %95 : vector<128x32xf32>
    %c0_52 = arith.constant 0 : index
    %c0_53 = arith.constant 0 : index
    %97 = vector.load %arg15[%c0_52, %c0_53] : memref<1x32xf32, #tpu.memory_space<vmem>>, vector<1x32xf32>
    %98 = vector.broadcast %97 : vector<1x32xf32> to vector<128x32xf32>
    %99 = arith.mulf %1, %98 : vector<128x32xf32>
    %100 = arith.addf %96, %99 : vector<128x32xf32>
    %c0_54 = arith.constant 0 : index
    %c0_55 = arith.constant 0 : index
    %101 = vector.load %arg16[%c0_54, %c0_55] : memref<1x32xf32, #tpu.memory_space<vmem>>, vector<1x32xf32>
    %102 = vector.broadcast %101 : vector<1x32xf32> to vector<128x32xf32>
    %103 = arith.mulf %2, %102 : vector<128x32xf32>
    %104 = arith.addf %100, %103 : vector<128x32xf32>
    %cst_56 = arith.constant dense<0.000000e+00> : vector<128xf32>
    %105 = vector.multi_reduction <add>, %104, %cst_56 [1] : vector<128x32xf32> to vector<128xf32>
    %106 = vector.shape_cast %105 : vector<128xf32> to vector<128x1xf32>
    %107 = arith.addf %93, %106 : vector<128x1xf32>
    %c0_57 = arith.constant 0 : index
    %108 = memref.load %arg17[%c0_57] : memref<1xf32, #tpu.memory_space<smem>>
    %109 = vector.broadcast %108 : f32 to vector<128x1xf32>
    %110 = arith.addf %107, %109 : vector<128x1xf32>
    %c0_58 = arith.constant 0 : index
    %c0_59 = arith.constant 0 : index
    %111 = vector.load %arg18[%c0_58, %c0_59] : memref<128x1xf32, #tpu.memory_space<vmem>>, vector<128x1xf32>
    tpu.vector_store %arg18[%c0_58, %c0_59], %110 {strides = array<i32>} : memref<128x1xf32, #tpu.memory_space<vmem>>, vector<128x1xf32>,
    return
  }
}

</mosaic_0001>

<llo_original>
// kernel: discriminator_forward.1
$region0: #{discriminator_forward.1}
  #allocation0 [shape = 'u32[]', space=smem, size = 0x4, offset = 0x4, fixed_abs, tag = 'smem constant byte address 0x4 - core index']
  #allocation1 [shape = 'u32[144,128]{1,0:T(1,128)}', space=vmem, size = 0x12000, scoped, tag = 'internal scratch']
  #allocation2 [shape = 'f32[1]{0:T(128)S(6)}', space=smem, size = 0x200, scoped, tag = 'scoped memory for discriminator_forward.1']
  %s0 = inlined_call_operand.vmem [shape: f32[128,32], index: 0, kind: input, shape index: {}]
  %s1 = inlined_call_operand.vmem [shape: f32[128,32], index: 1, kind: input, shape index: {}]
  %s2 = inlined_call_operand.vmem [shape: f32[128,32], index: 2, kind: input, shape index: {}]
  %s3 = inlined_call_operand.vmem [shape: bf16[32,128], index: 3, kind: input, shape index: {}]
  %s4 = inlined_call_operand.vmem [shape: bf16[32,128], index: 4, kind: input, shape index: {}]
  %s5 = inlined_call_operand.vmem [shape: bf16[32,128], index: 5, kind: input, shape index: {}]
  %s6 = inlined_call_operand.vmem [shape: f32[1,128], index: 6, kind: input, shape index: {}]
  %s7 = inlined_call_operand.vmem [shape: f32[1,128], index: 7, kind: input, shape index: {}]
  %s8 = inlined_call_operand.vmem [shape: bf16[128,128], index: 8, kind: input, shape index: {}]
  %s9 = inlined_call_operand.vmem [shape: f32[1,128], index: 9, kind: input, shape index: {}]
  %s10 = inlined_call_operand.vmem [shape: f32[1,128], index: 10, kind: input, shape index: {}]
  %s11 = inlined_call_operand.vmem [shape: bf16[128,128], index: 11, kind: input, shape index: {}]
  %s12 = inlined_call_operand.vmem [shape: f32[1,128], index: 12, kind: input, shape index: {}]
  %s13 = inlined_call_operand.vmem [shape: f32[1,128], index: 13, kind: input, shape index: {}]
  %s14 = inlined_call_operand.vmem [shape: f32[1,32], index: 14, kind: input, shape index: {}]
  %s15 = inlined_call_operand.vmem [shape: f32[1,32], index: 15, kind: input, shape index: {}]
  %s16 = inlined_call_operand.vmem [shape: f32[1,32], index: 16, kind: input, shape index: {}]
  %s17 = inlined_call_operand.<no memory space> [shape: f32[1], index: 17, kind: input, shape index: {}]
  %s18 = inlined_call_operand.vmem [shape: f32[128,1], index: 18, kind: output, shape index: {}]
  %s19 = sld [smem:[#allocation0]]
  $region82: #{discriminator_forward.1} parent=0
    _
  %s21 = ssub.s32 1, %s19
  %s22 = scalar_select 0, %s21, %s19
  %23 = sst [smem:[#allocation2]] %s17
  // Predicated region
  $region2: #{discriminator_forward.1} parent=0 // pred_check
    _
  $region3: #{discriminator_forward.1} parent=0 // pred_check_branch
    %25 = sbr.rel (0) target = $region5
  $region4: #{discriminator_forward.1} parent=0 // pred_region
    _
  $region5: #{discriminator_forward.1} parent=0 // pred_fallthru
    _
  // Predicated region
  $region6: #{discriminator_forward.1} parent=0 // pred_check
    _
  $region7: #{discriminator_forward.1} parent=0 // pred_check_branch
    %27 = sbr.rel (0) target = $region9
  $region8: #{discriminator_forward.1} parent=0 // pred_region
    _
  $region9: #{discriminator_forward.1} parent=0 // pred_fallthru
    _
  // Predicated region
  $region10: #{discriminator_forward.1} parent=0 // pred_check
    _
  $region11: #{discriminator_forward.1} parent=0 // pred_check_branch
    %29 = sbr.rel (0) target = $region13
  $region12: #{discriminator_forward.1} parent=0 // pred_region
    _
  $region13: #{discriminator_forward.1} parent=0 // pred_fallthru
    _
  // Predicated region
  $region14: #{discriminator_forward.1} parent=0 // pred_check
    _
  $region15: #{discriminator_forward.1} parent=0 // pred_check_branch
    %31 = sbr.rel (0) target = $region17
  $region16: #{discriminator_forward.1} parent=0 // pred_region
    _
  $region17: #{discriminator_forward.1} parent=0 // pred_fallthru
    _
  // Predicated region
  $region18: #{discriminator_forward.1} parent=0 // pred_check
    _
  $region19: #{discriminator_forward.1} parent=0 // pred_check_branch
    %33 = sbr.rel (0) target = $region21
  $region20: #{discriminator_forward.1} parent=0 // pred_region
    _
  $region21: #{discriminator_forward.1} parent=0 // pred_fallthru
    _
  // Predicated region
  $region22: #{discriminator_forward.1} parent=0 // pred_check
    _
  $region23: #{discriminator_forward.1} parent=0 // pred_check_branch
    %35 = sbr.rel (0) target = $region25
  $region24: #{discriminator_forward.1} parent=0 // pred_region
    _
  $region25: #{discriminator_forward.1} parent=0 // pred_fallthru
    _
  // Predicated region
  $region26: #{discriminator_forward.1} parent=0 // pred_check
    _
  $region27: #{discriminator_forward.1} parent=0 // pred_check_branch
    %37 = sbr.rel (0) target = $region29
  $region28: #{discriminator_forward.1} parent=0 // pred_region
    _
  $region29: #{discriminator_forward.1} parent=0 // pred_fallthru
    _
  // Predicated region
  $region30: #{discriminator_forward.1} parent=0 // pred_check
    _
  $region31: #{discriminator_forward.1} parent=0 // pred_check_branch
    %39 = sbr.rel (0) target = $region33
  $region32: #{discriminator_forward.1} parent=0 // pred_region
    _
  $region33: #{discriminator_forward.1} parent=0 // pred_fallthru
    _
  // Predicated region
  $region34: #{discriminator_forward.1} parent=0 // pred_check
    _
  $region35: #{discriminator_forward.1} parent=0 // pred_check_branch
    %41 = sbr.rel (0) target = $region37
  $region36: #{discriminator_forward.1} parent=0 // pred_region
    _
  $region37: #{discriminator_forward.1} parent=0 // pred_fallthru
    _
  // Predicated region
  $region38: #{discriminator_forward.1} parent=0 // pred_check
    _
  $region39: #{discriminator_forward.1} parent=0 // pred_check_branch
    %43 = sbr.rel (0) target = $region41
  $region40: #{discriminator_forward.1} parent=0 // pred_region
    _
  $region41: #{discriminator_forward.1} parent=0 // pred_fallthru
    _
  // Predicated region
  $region42: #{discriminator_forward.1} parent=0 // pred_check
    _
  $region43: #{discriminator_forward.1} parent=0 // pred_check_branch
    %45 = sbr.rel (0) target = $region45
  $region44: #{discriminator_forward.1} parent=0 // pred_region
    _
  $region45: #{discriminator_forward.1} parent=0 // pred_fallthru
    _
  // Predicated region
  $region46: #{discriminator_forward.1} parent=0 // pred_check
    _
  $region47: #{discriminator_forward.1} parent=0 // pred_check_branch
    %47 = sbr.rel (0) target = $region49
  $region48: #{discriminator_forward.1} parent=0 // pred_region
    _
  $region49: #{discriminator_forward.1} parent=0 // pred_fallthru
    _
  // Predicated region
  $region50: #{discriminator_forward.1} parent=0 // pred_check
    _
  $region51: #{discriminator_forward.1} parent=0 // pred_check_branch
    %49 = sbr.rel (0) target = $region53
  $region52: #{discriminator_forward.1} parent=0 // pred_region
    _
  $region53: #{discriminator_forward.1} parent=0 // pred_fallthru
    _
  // Predicated region
  $region54: #{discriminator_forward.1} parent=0 // pred_check
    _
  $region55: #{discriminator_forward.1} parent=0 // pred_check_branch
    %51 = sbr.rel (0) target = $region57
  $region56: #{discriminator_forward.1} parent=0 // pred_region
    _
  $region57: #{discriminator_forward.1} parent=0 // pred_fallthru
    _
  // Predicated region
  $region58: #{discriminator_forward.1} parent=0 // pred_check
    _
  $region59: #{discriminator_forward.1} parent=0 // pred_check_branch
    %53 = sbr.rel (0) target = $region61
  $region60: #{discriminator_forward.1} parent=0 // pred_region
    _
  $region61: #{discriminator_forward.1} parent=0 // pred_fallthru
    _
  // Predicated region
  $region62: #{discriminator_forward.1} parent=0 // pred_check
    _
  $region63: #{discriminator_forward.1} parent=0 // pred_check_branch
    %55 = sbr.rel (0) target = $region65
  $region64: #{discriminator_forward.1} parent=0 // pred_region
    _
  $region65: #{discriminator_forward.1} parent=0 // pred_fallthru
    _
  // Predicated region
  $region66: #{discriminator_forward.1} parent=0 // pred_check
    _
  $region67: #{discriminator_forward.1} parent=0 // pred_check_branch
    %57 = sbr.rel (0) target = $region69
  $region68: #{discriminator_forward.1} parent=0 // pred_region
    _
  $region69: #{discriminator_forward.1} parent=0 // pred_fallthru
    _
  // Predicated region
  $region70: #{discriminator_forward.1} parent=0 // pred_check
    _
  $region71: #{discriminator_forward.1} parent=0 // pred_check_branch
    %59 = sbr.rel (0) target = $region73
  $region72: #{discriminator_forward.1} parent=0 // pred_region
    _
  $region73: #{discriminator_forward.1} parent=0 // pred_fallthru
    _
  %v61 = vld [vmem:[%s0] sm:$0xff]
  %v62 = vld [vmem:[%s0 + $0x8] sm:$0xff]
  %v63 = vld [vmem:[%s0 + $0x10] sm:$0xff]
  %v64 = vld [vmem:[%s0 + $0x18] sm:$0xff]
  %v65 = vld [vmem:[%s0 + $0x20] sm:$0xff]
  %v66 = vld [vmem:[%s0 + $0x28] sm:$0xff]
  %v67 = vld [vmem:[%s0 + $0x30] sm:$0xff]
  %v68 = vld [vmem:[%s0 + $0x38] sm:$0xff]
  %v69 = vld [vmem:[%s0 + $0x40] sm:$0xff]
  %v70 = vld [vmem:[%s0 + $0x48] sm:$0xff]
  %v71 = vld [vmem:[%s0 + $0x50] sm:$0xff]
  %v72 = vld [vmem:[%s0 + $0x58] sm:$0xff]
  %v73 = vld [vmem:[%s0 + $0x60] sm:$0xff]
  %v74 = vld [vmem:[%s0 + $0x68] sm:$0xff]
  %v75 = vld [vmem:[%s0 + $0x70] sm:$0xff]
  %v76 = vld [vmem:[%s0 + $0x78] sm:$0xff]
  %v77 = vld [vmem:[%s1] sm:$0xff]
  %v78 = vld [vmem:[%s1 + $0x8] sm:$0xff]
  %v79 = vld [vmem:[%s1 + $0x10] sm:$0xff]
  %v80 = vld [vmem:[%s1 + $0x18] sm:$0xff]
  %v81 = vld [vmem:[%s1 + $0x20] sm:$0xff]
  %v82 = vld [vmem:[%s1 + $0x28] sm:$0xff]
  %v83 = vld [vmem:[%s1 + $0x30] sm:$0xff]
  %v84 = vld [vmem:[%s1 + $0x38] sm:$0xff]
  %v85 = vld [vmem:[%s1 + $0x40] sm:$0xff]
  %v86 = vld [vmem:[%s1 + $0x48] sm:$0xff]
  %v87 = vld [vmem:[%s1 + $0x50] sm:$0xff]
  %v88 = vld [vmem:[%s1 + $0x58] sm:$0xff]
  %v89 = vld [vmem:[%s1 + $0x60] sm:$0xff]
  %v90 = vld [vmem:[%s1 + $0x68] sm:$0xff]
  %v91 = vld [vmem:[%s1 + $0x70] sm:$0xff]
  %v92 = vld [vmem:[%s1 + $0x78] sm:$0xff]
  %v93 = vld [vmem:[%s2] sm:$0xff]
  %v94 = vld [vmem:[%s2 + $0x8] sm:$0xff]
  %v95 = vld [vmem:[%s2 + $0x10] sm:$0xff]
  %v96 = vld [vmem:[%s2 + $0x18] sm:$0xff]
  %v97 = vld [vmem:[%s2 + $0x20] sm:$0xff]
  %v98 = vld [vmem:[%s2 + $0x28] sm:$0xff]
  %v99 = vld [vmem:[%s2 + $0x30] sm:$0xff]
  %v100 = vld [vmem:[%s2 + $0x38] sm:$0xff]
  %v101 = vld [vmem:[%s2 + $0x40] sm:$0xff]
  %v102 = vld [vmem:[%s2 + $0x48] sm:$0xff]
  %v103 = vld [vmem:[%s2 + $0x50] sm:$0xff]
  %v104 = vld [vmem:[%s2 + $0x58] sm:$0xff]
  %v105 = vld [vmem:[%s2 + $0x60] sm:$0xff]
  %v106 = vld [vmem:[%s2 + $0x68] sm:$0xff]
  %v107 = vld [vmem:[%s2 + $0x70] sm:$0xff]
  %v108 = vld [vmem:[%s2 + $0x78] sm:$0xff]
  %v109 = vpack.c.bf16 %v62, %v61
  %v110 = vpack.c.bf16 %v64, %v63
  %v111 = vpack.c.bf16 %v66, %v65
  %v112 = vpack.c.bf16 %v68, %v67
  %v113 = vpack.c.bf16 %v70, %v69
  %v114 = vpack.c.bf16 %v72, %v71
  %v115 = vpack.c.bf16 %v74, %v73
  %v116 = vpack.c.bf16 %v76, %v75
  %v117 = vld [vmem:[%s3] sm:$0xf]
  %v118 = vld [vmem:[%s3 + $0x4] sm:$0xf]
  %v119 = vld [vmem:[%s3 + $0x8] sm:$0xf]
  %v120 = vld [vmem:[%s3 + $0xc] sm:$0xf]
  %v121 = vpack.c.bf16 %v78, %v77
  %v122 = vpack.c.bf16 %v80, %v79
  %v123 = vpack.c.bf16 %v82, %v81
  %v124 = vpack.c.bf16 %v84, %v83
  %v125 = vpack.c.bf16 %v86, %v85
  %v126 = vpack.c.bf16 %v88, %v87
  %v127 = vpack.c.bf16 %v90, %v89
  %v128 = vpack.c.bf16 %v92, %v91
  %v129 = vld [vmem:[%s4] sm:$0xf]
  %v130 = vld [vmem:[%s4 + $0x4] sm:$0xf]
  %v131 = vld [vmem:[%s4 + $0x8] sm:$0xf]
  %v132 = vld [vmem:[%s4 + $0xc] sm:$0xf]
  %v137 = vunpack.c.l.b16 %v129
  %v138 = vunpack.c.l.b16 %v130
  %v139 = vunpack.c.l.b16 %v131
  %v140 = vunpack.c.l.b16 %v132
  %v141 = vpack.c.b16 %v138, %v137
  %v142 = vpack.c.b16 %v140, %v139
  %vm145 = vcmask 261120
  %v147 = vsel %vm145, %v121, 0
  %v150 = vsel %vm145, %v122, 0
  %v153 = vsel %vm145, %v123, 0
  %v156 = vsel %vm145, %v124, 0
  %v159 = vsel %vm145, %v125, 0
  %v162 = vsel %vm145, %v126, 0
  %v165 = vsel %vm145, %v127, 0
  %v168 = vsel %vm145, %v128, 0
  %170 = vmatprep.subr.bf16.mxu0 0
  %171 = vmatpush1.bf16.msra.mxu0 0
  %172 = vmatprep.subr.bf16.mxu0 0
  %173 = vmatpush1.bf16.msra.mxu0 0
  %174 = vmatprep.subr.bf16.mxu0 0
  %175 = vmatpush1.bf16.msra.mxu0 0
  %176 = vmatprep.subr.bf16.mxu0 0
  %177 = vmatpush1.bf16.msra.mxu0 0
  %178 = vmatprep.subr.bf16.mxu0 0
  %179 = vmatpush1.bf16.msra.mxu0 0
  %180 = vmatprep.subr.bf16.mxu0 0
  %181 = vmatpush1.bf16.msra.mxu0 0
  %182 = vmatprep.subr.bf16.mxu0 0
  %183 = vmatpush1.bf16.msra.mxu0 %v142
  %184 = vmatprep.subr.bf16.mxu0 0
  %185 = vmatpush1.bf16.msra.mxu0 %v141
  %186 = vmatprep.subr.bf16.mxu0 0
  %187 = vmatpush2.bf16.msra.mxu0 0
  %188 = vmatprep.subr.bf16.mxu0 0
  %189 = vmatpush2.bf16.msra.mxu0 0
  %190 = vmatprep.subr.bf16.mxu0 0
  %191 = vmatpush2.bf16.msra.mxu0 0
  %192 = vmatprep.subr.bf16.mxu0 0
  %193 = vmatpush2.bf16.msra.mxu0 0
  %194 = vmatprep.subr.bf16.mxu0 0
  %195 = vmatpush2.bf16.msra.mxu0 0
  %196 = vmatprep.subr.bf16.mxu0 0
  %197 = vmatpush2.bf16.msra.mxu0 0
  %198 = vmatprep.subr.bf16.mxu0 0
  %199 = vmatpush2.bf16.msra.mxu0 0
  %200 = vmatprep.subr.bf16.mxu0 0
  %201 = vmatpush2.bf16.msra.mxu0 0
  %202 = vmatprep.mubr.bf16.mxu0 0
  %203 = vmatmul.mubr.bf16.gmra.mxu0 %v147
  %v204 = vpop.f32.mrf.mxu0
  %v205 = vadd.f32 0.0, %v204
  %v206 = vpop.f32.mrf.mxu0
  %v207 = vpop.f32.mrf.mxu0
  %v208 = vadd.f32 0.0, %v207
  %v209 = vpop.f32.mrf.mxu0
  %210 = vmatprep.mubr.bf16.mxu0 0
  %211 = vmatmul.mubr.bf16.gmra.mxu0 %v150
  %v212 = vpop.f32.mrf.mxu0
  %v213 = vadd.f32 0.0, %v212
  %v214 = vpop.f32.mrf.mxu0
  %v215 = vpop.f32.mrf.mxu0
  %v216 = vadd.f32 0.0, %v215
  %v217 = vpop.f32.mrf.mxu0
  %218 = vmatprep.mubr.bf16.mxu0 0
  %219 = vmatmul.mubr.bf16.gmra.mxu0 %v153
  %v220 = vpop.f32.mrf.mxu0
  %v221 = vadd.f32 0.0, %v220
  %v222 = vpop.f32.mrf.mxu0
  %v223 = vpop.f32.mrf.mxu0
  %v224 = vadd.f32 0.0, %v223
  %v225 = vpop.f32.mrf.mxu0
  %226 = vmatprep.mubr.bf16.mxu0 0
  %227 = vmatmul.mubr.bf16.gmra.mxu0 %v156
  %v228 = vpop.f32.mrf.mxu0
  %v229 = vadd.f32 0.0, %v228
  %v230 = vpop.f32.mrf.mxu0
  %v231 = vpop.f32.mrf.mxu0
  %v232 = vadd.f32 0.0, %v231
  %v233 = vpop.f32.mrf.mxu0
  %234 = vmatprep.mubr.bf16.mxu0 0
  %235 = vmatmul.mubr.bf16.gmra.mxu0 %v159
  %v236 = vpop.f32.mrf.mxu0
  %v237 = vadd.f32 0.0, %v236
  %v238 = vpop.f32.mrf.mxu0
  %v239 = vpop.f32.mrf.mxu0
  %v240 = vadd.f32 0.0, %v239
  %v241 = vpop.f32.mrf.mxu0
  %242 = vmatprep.mubr.bf16.mxu0 0
  %243 = vmatmul.mubr.bf16.gmra.mxu0 %v162
  %v244 = vpop.f32.mrf.mxu0
  %v245 = vadd.f32 0.0, %v244
  %v246 = vpop.f32.mrf.mxu0
  %v247 = vpop.f32.mrf.mxu0
  %v248 = vadd.f32 0.0, %v247
  %v249 = vpop.f32.mrf.mxu0
  %250 = vmatprep.mubr.bf16.mxu0 0
  %251 = vmatmul.mubr.bf16.gmra.mxu0 %v165
  %v252 = vpop.f32.mrf.mxu0
  %v253 = vadd.f32 0.0, %v252
  %v254 = vpop.f32.mrf.mxu0
  %v255 = vpop.f32.mrf.mxu0
  %v256 = vadd.f32 0.0, %v255
  %v257 = vpop.f32.mrf.mxu0
  %258 = vmatprep.mubr.bf16.mxu0 0
  %259 = vmatmul.mubr.bf16.gmra.mxu0 %v168
  %v260 = vpop.f32.mrf.mxu0
  %v261 = vadd.f32 0.0, %v260
  %v262 = vpop.f32.mrf.mxu0
  %v263 = vpop.f32.mrf.mxu0
  %v264 = vadd.f32 0.0, %v263
  %v265 = vpop.f32.mrf.mxu0
  %266 = vdwg.mxu0
  %v271 = vunpack.c.l.b16 %v117
  %v272 = vunpack.c.l.b16 %v118
  %v273 = vunpack.c.l.b16 %v119
  %v274 = vunpack.c.l.b16 %v120
  %v275 = vpack.c.b16 %v272, %v271
  %v276 = vpack.c.b16 %v274, %v273
  %v280 = vsel %vm145, %v109, 0
  %v283 = vsel %vm145, %v110, 0
  %v286 = vsel %vm145, %v111, 0
  %v289 = vsel %vm145, %v112, 0
  %v292 = vsel %vm145, %v113, 0
  %v295 = vsel %vm145, %v114, 0
  %v298 = vsel %vm145, %v115, 0
  %v301 = vsel %vm145, %v116, 0
  %303 = vmatprep.subr.bf16.mxu0 0
  %304 = vmatpush1.bf16.msra.mxu0 0
  %305 = vmatprep.subr.bf16.mxu0 0
  %306 = vmatpush1.bf16.msra.mxu0 0
  %307 = vmatprep.subr.bf16.mxu0 0
  %308 = vmatpush1.bf16.msra.mxu0 0
  %309 = vmatprep.subr.bf16.mxu0 0
  %310 = vmatpush1.bf16.msra.mxu0 0
  %311 = vmatprep.subr.bf16.mxu0 0
  %312 = vmatpush1.bf16.msra.mxu0 0
  %313 = vmatprep.subr.bf16.mxu0 0
  %314 = vmatpush1.bf16.msra.mxu0 0
  %315 = vmatprep.subr.bf16.mxu0 0
  %316 = vmatpush1.bf16.msra.mxu0 %v276
  %317 = vmatprep.subr.bf16.mxu0 0
  %318 = vmatpush1.bf16.msra.mxu0 %v275
  %319 = vmatprep.subr.bf16.mxu0 0
  %320 = vmatpush2.bf16.msra.mxu0 0
  %321 = vmatprep.subr.bf16.mxu0 0
  %322 = vmatpush2.bf16.msra.mxu0 0
  %323 = vmatprep.subr.bf16.mxu0 0
  %324 = vmatpush2.bf16.msra.mxu0 0
  %325 = vmatprep.subr.bf16.mxu0 0
  %326 = vmatpush2.bf16.msra.mxu0 0
  %327 = vmatprep.subr.bf16.mxu0 0
  %328 = vmatpush2.bf16.msra.mxu0 0
  %329 = vmatprep.subr.bf16.mxu0 0
  %330 = vmatpush2.bf16.msra.mxu0 0
  %331 = vmatprep.subr.bf16.mxu0 0
  %332 = vmatpush2.bf16.msra.mxu0 0
  %333 = vmatprep.subr.bf16.mxu0 0
  %334 = vmatpush2.bf16.msra.mxu0 0
  %335 = vmatprep.mubr.bf16.mxu0 0
  %336 = vmatmul.mubr.bf16.gmra.mxu0 %v280
  %v337 = vpop.f32.mrf.mxu0
  %v338 = vadd.f32 %v205, %v337
  %v339 = vpop.f32.mrf.mxu0
  %v340 = vpop.f32.mrf.mxu0
  %v341 = vadd.f32 %v208, %v340
  %v342 = vpop.f32.mrf.mxu0
  %343 = vmatprep.mubr.bf16.mxu0 0
  %344 = vmatmul.mubr.bf16.gmra.mxu0 %v283
  %v345 = vpop.f32.mrf.mxu0
  %v346 = vadd.f32 %v213, %v345
  %v347 = vpop.f32.mrf.mxu0
  %v348 = vpop.f32.mrf.mxu0
  %v349 = vadd.f32 %v216, %v348
  %v350 = vpop.f32.mrf.mxu0
  %351 = vmatprep.mubr.bf16.mxu0 0
  %352 = vmatmul.mubr.bf16.gmra.mxu0 %v286
  %v353 = vpop.f32.mrf.mxu0
  %v354 = vadd.f32 %v221, %v353
  %v355 = vpop.f32.mrf.mxu0
  %v356 = vpop.f32.mrf.mxu0
  %v357 = vadd.f32 %v224, %v356
  %v358 = vpop.f32.mrf.mxu0
  %359 = vmatprep.mubr.bf16.mxu0 0
  %360 = vmatmul.mubr.bf16.gmra.mxu0 %v289
  %v361 = vpop.f32.mrf.mxu0
  %v362 = vadd.f32 %v229, %v361
  %v363 = vpop.f32.mrf.mxu0
  %v364 = vpop.f32.mrf.mxu0
  %v365 = vadd.f32 %v232, %v364
  %v366 = vpop.f32.mrf.mxu0
  %367 = vmatprep.mubr.bf16.mxu0 0
  %368 = vmatmul.mubr.bf16.gmra.mxu0 %v292
  %v369 = vpop.f32.mrf.mxu0
  %v370 = vadd.f32 %v237, %v369
  %v371 = vpop.f32.mrf.mxu0
  %v372 = vpop.f32.mrf.mxu0
  %v373 = vadd.f32 %v240, %v372
  %v374 = vpop.f32.mrf.mxu0
  %375 = vmatprep.mubr.bf16.mxu0 0
  %376 = vmatmul.mubr.bf16.gmra.mxu0 %v295
  %v377 = vpop.f32.mrf.mxu0
  %v378 = vadd.f32 %v245, %v377
  %v379 = vpop.f32.mrf.mxu0
  %v380 = vpop.f32.mrf.mxu0
  %v381 = vadd.f32 %v248, %v380
  %v382 = vpop.f32.mrf.mxu0
  %383 = vmatprep.mubr.bf16.mxu0 0
  %384 = vmatmul.mubr.bf16.gmra.mxu0 %v298
  %v385 = vpop.f32.mrf.mxu0
  %v386 = vadd.f32 %v253, %v385
  %v387 = vpop.f32.mrf.mxu0
  %v388 = vpop.f32.mrf.mxu0
  %v389 = vadd.f32 %v256, %v388
  %v390 = vpop.f32.mrf.mxu0
  %391 = vmatprep.mubr.bf16.mxu0 0
  %392 = vmatmul.mubr.bf16.gmra.mxu0 %v301
  %v393 = vpop.f32.mrf.mxu0
  %v394 = vadd.f32 %v261, %v393
  %v395 = vpop.f32.mrf.mxu0
  %v396 = vpop.f32.mrf.mxu0
  %v397 = vadd.f32 %v264, %v396
  %v398 = vpop.f32.mrf.mxu0
  %399 = vdwg.mxu0
  %v400 = vpack.c.bf16 %v94, %v93
  %v401 = vpack.c.bf16 %v96, %v95
  %v402 = vpack.c.bf16 %v98, %v97
  %v403 = vpack.c.bf16 %v100, %v99
  %v404 = vpack.c.bf16 %v102, %v101
  %v405 = vpack.c.bf16 %v104, %v103
  %v406 = vpack.c.bf16 %v106, %v105
  %v407 = vpack.c.bf16 %v108, %v107
  %v408 = vld [vmem:[%s5] sm:$0xf]
  %v409 = vld [vmem:[%s5 + $0x4] sm:$0xf]
  %v410 = vld [vmem:[%s5 + $0x8] sm:$0xf]
  %v411 = vld [vmem:[%s5 + $0xc] sm:$0xf]
  %v416 = vunpack.c.l.b16 %v408
  %v417 = vunpack.c.l.b16 %v409
  %v418 = vunpack.c.l.b16 %v410
  %v419 = vunpack.c.l.b16 %v411
  %v420 = vpack.c.b16 %v417, %v416
  %v421 = vpack.c.b16 %v419, %v418
  %v425 = vsel %vm145, %v400, 0
  %v428 = vsel %vm145, %v401, 0
  %v431 = vsel %vm145, %v402, 0
  %v434 = vsel %vm145, %v403, 0
  %v437 = vsel %vm145, %v404, 0
  %v440 = vsel %vm145, %v405, 0
  %v443 = vsel %vm145, %v406, 0
  %v446 = vsel %vm145, %v407, 0
  %448 = vmatprep.subr.bf16.mxu0 0
  %449 = vmatpush1.bf16.msra.mxu0 0
  %450 = vmatprep.subr.bf16.mxu0 0
  %451 = vmatpush1.bf16.msra.mxu0 0
  %452 = vmatprep.subr.bf16.mxu0 0
  %453 = vmatpush1.bf16.msra.mxu0 0
  %454 = vmatprep.subr.bf16.mxu0 0
  %455 = vmatpush1.bf16.msra.mxu0 0
  %456 = vmatprep.subr.bf16.mxu0 0
  %457 = vmatpush1.bf16.msra.mxu0 0
  %458 = vmatprep.subr.bf16.mxu0 0
  %459 = vmatpush1.bf16.msra.mxu0 0
  %460 = vmatprep.subr.bf16.mxu0 0
  %461 = vmatpush1.bf16.msra.mxu0 %v421
  %462 = vmatprep.subr.bf16.mxu0 0
  %463 = vmatpush1.bf16.msra.mxu0 %v420
  %464 = vmatprep.subr.bf16.mxu0 0
  %465 = vmatpush2.bf16.msra.mxu0 0
  %466 = vmatprep.subr.bf16.mxu0 0
  %467 = vmatpush2.bf16.msra.mxu0 0
  %468 = vmatprep.subr.bf16.mxu0 0
  %469 = vmatpush2.bf16.msra.mxu0 0
  %470 = vmatprep.subr.bf16.mxu0 0
  %471 = vmatpush2.bf16.msra.mxu0 0
  %472 = vmatprep.subr.bf16.mxu0 0
  %473 = vmatpush2.bf16.msra.mxu0 0
  %474 = vmatprep.subr.bf16.mxu0 0
  %475 = vmatpush2.bf16.msra.mxu0 0
  %476 = vmatprep.subr.bf16.mxu0 0
  %477 = vmatpush2.bf16.msra.mxu0 0
  %478 = vmatprep.subr.bf16.mxu0 0
  %479 = vmatpush2.bf16.msra.mxu0 0
  %480 = vmatprep.mubr.bf16.mxu0 0
  %481 = vmatmul.mubr.bf16.gmra.mxu0 %v425
  %v482 = vpop.f32.mrf.mxu0
  %v483 = vadd.f32 0.0, %v482
  %v484 = vpop.f32.mrf.mxu0
  %v485 = vpop.f32.mrf.mxu0
  %v486 = vadd.f32 0.0, %v485
  %v487 = vpop.f32.mrf.mxu0
  %488 = vmatprep.mubr.bf16.mxu0 0
  %489 = vmatmul.mubr.bf16.gmra.mxu0 %v428
  %v490 = vpop.f32.mrf.mxu0
  %v491 = vadd.f32 0.0, %v490
  %v492 = vpop.f32.mrf.mxu0
  %v493 = vpop.f32.mrf.mxu0
  %v494 = vadd.f32 0.0, %v493
  %v495 = vpop.f32.mrf.mxu0
  %496 = vmatprep.mubr.bf16.mxu0 0
  %497 = vmatmul.mubr.bf16.gmra.mxu0 %v431
  %v498 = vpop.f32.mrf.mxu0
  %v499 = vadd.f32 0.0, %v498
  %v500 = vpop.f32.mrf.mxu0
  %v501 = vpop.f32.mrf.mxu0
  %v502 = vadd.f32 0.0, %v501
  %v503 = vpop.f32.mrf.mxu0
  %504 = vmatprep.mubr.bf16.mxu0 0
  %505 = vmatmul.mubr.bf16.gmra.mxu0 %v434
  %v506 = vpop.f32.mrf.mxu0
  %v507 = vadd.f32 0.0, %v506
  %v508 = vpop.f32.mrf.mxu0
  %v509 = vpop.f32.mrf.mxu0
  %v510 = vadd.f32 0.0, %v509
  %v511 = vpop.f32.mrf.mxu0
  %512 = vmatprep.mubr.bf16.mxu0 0
  %513 = vmatmul.mubr.bf16.gmra.mxu0 %v437
  %v514 = vpop.f32.mrf.mxu0
  %v515 = vadd.f32 0.0, %v514
  %v516 = vpop.f32.mrf.mxu0
  %v517 = vpop.f32.mrf.mxu0
  %v518 = vadd.f32 0.0, %v517
  %v519 = vpop.f32.mrf.mxu0
  %520 = vmatprep.mubr.bf16.mxu0 0
  %521 = vmatmul.mubr.bf16.gmra.mxu0 %v440
  %v522 = vpop.f32.mrf.mxu0
  %v523 = vadd.f32 0.0, %v522
  %v524 = vpop.f32.mrf.mxu0
  %v525 = vpop.f32.mrf.mxu0
  %v526 = vadd.f32 0.0, %v525
  %v527 = vpop.f32.mrf.mxu0
  %528 = vmatprep.mubr.bf16.mxu0 0
  %529 = vmatmul.mubr.bf16.gmra.mxu0 %v443
  %v530 = vpop.f32.mrf.mxu0
  %v531 = vadd.f32 0.0, %v530
  %v532 = vpop.f32.mrf.mxu0
  %v533 = vpop.f32.mrf.mxu0
  %v534 = vadd.f32 0.0, %v533
  %v535 = vpop.f32.mrf.mxu0
  %536 = vmatprep.mubr.bf16.mxu0 0
  %537 = vmatmul.mubr.bf16.gmra.mxu0 %v446
  %v538 = vpop.f32.mrf.mxu0
  %v539 = vadd.f32 0.0, %v538
  %v540 = vpop.f32.mrf.mxu0
  %v541 = vpop.f32.mrf.mxu0
  %v542 = vadd.f32 0.0, %v541
  %v543 = vpop.f32.mrf.mxu0
  %544 = vdwg.mxu0
  %v545 = vadd.f32 %v338, %v483
  %v546 = vadd.f32 %v341, %v486
  %v547 = vadd.f32 %v346, %v491
  %v548 = vadd.f32 %v349, %v494
  %v549 = vadd.f32 %v354, %v499
  %v550 = vadd.f32 %v357, %v502
  %v551 = vadd.f32 %v362, %v507
  %v552 = vadd.f32 %v365, %v510
  %v553 = vadd.f32 %v370, %v515
  %v554 = vadd.f32 %v373, %v518
  %v555 = vadd.f32 %v378, %v523
  %v556 = vadd.f32 %v381, %v526
  %v557 = vadd.f32 %v386, %v531
  %v558 = vadd.f32 %v389, %v534
  %v559 = vadd.f32 %v394, %v539
  %v560 = vadd.f32 %v397, %v542
  %v561 = vld [vmem:[%s6] sm:$0x1]
  %v562 = vld [vmem:[%s7] sm:$0x1]
  %v563 = vadd.f32 %v545, %v546
  %v564 = vadd.f32 %v563, %v547
  %v565 = vadd.f32 %v564, %v548
  %v566 = vadd.f32 %v565, %v549
  %v567 = vadd.f32 %v566, %v550
  %v568 = vadd.f32 %v567, %v551
  %v569 = vadd.f32 %v568, %v552
  %v570 = vadd.f32 %v569, %v553
  %v571 = vadd.f32 %v570, %v554
  %v572 = vadd.f32 %v571, %v555
  %v573 = vadd.f32 %v572, %v556
  %v574 = vadd.f32 %v573, %v557
  %v575 = vadd.f32 %v574, %v558
  %v576 = vadd.f32 %v575, %v559
  %v577 = vadd.f32 %v576, %v560
  %v578 = vrot.slane %v577, 4
  %v579 = vadd.f32 %v577, %v578
  %v580 = vrot.slane %v579, 2
  %v581 = vadd.f32 %v579, %v580
  %v582 = vrot.slane %v581, 1
  %v583 = vadd.f32 %v581, %v582
  %v584 = vrcp.pop 128.0
  %v585 = vmul.f32 %v583, %v584
  %v586 = vmul.f32 %v545, %v545
  %v587 = vmul.f32 %v546, %v546
  %v588 = vmul.f32 %v547, %v547
  %v589 = vmul.f32 %v548, %v548
  %v590 = vmul.f32 %v549, %v549
  %v591 = vmul.f32 %v550, %v550
  %v592 = vmul.f32 %v551, %v551
  %v593 = vmul.f32 %v552, %v552
  %v594 = vmul.f32 %v553, %v553
  %v595 = vmul.f32 %v554, %v554
  %v596 = vmul.f32 %v555, %v555
  %v597 = vmul.f32 %v556, %v556
  %v598 = vmul.f32 %v557, %v557
  %v599 = vmul.f32 %v558, %v558
  %v600 = vmul.f32 %v559, %v559
  %v601 = vmul.f32 %v560, %v560
  %v602 = vadd.f32 %v586, %v587
  %v603 = vadd.f32 %v602, %v588
  %v604 = vadd.f32 %v603, %v589
  %v605 = vadd.f32 %v604, %v590
  %v606 = vadd.f32 %v605, %v591
  %v607 = vadd.f32 %v606, %v592
  %v608 = vadd.f32 %v607, %v593
  %v609 = vadd.f32 %v608, %v594
  %v610 = vadd.f32 %v609, %v595
  %v611 = vadd.f32 %v610, %v596
  %v612 = vadd.f32 %v611, %v597
  %v613 = vadd.f32 %v612, %v598
  %v614 = vadd.f32 %v613, %v599
  %v615 = vadd.f32 %v614, %v600
  %v616 = vadd.f32 %v615, %v601
  %v617 = vrot.slane %v616, 4
  %v618 = vadd.f32 %v616, %v617
  %v619 = vrot.slane %v618, 2
  %v620 = vadd.f32 %v618, %v619
  %v621 = vrot.slane %v620, 1
  %v622 = vadd.f32 %v620, %v621
  %v623 = vmul.f32 %v622, %v584
  %v624 = vmul.f32 %v585, %v585
  %v625 = vsub.f32 %v623, %v624
  %v626 = vmax.f32 %v625, 0.0
  %v627 = vadd.f32 %v626, 1e-05
  %v628 = vrsqrt.pop %v627
  %v629 = vmul.f32 %v561, %v628
  %v630 = vmul.f32 %v585, %v629
  %v631 = vsub.f32 %v562, %v630
  %v633 = vlaneseq
  %v634 = vshrl.u32 %v633, 7
  %v635 = vsub.s32 0, %v634
  %v636 = vrot.slane %v629, %v635
  %v638 = vmul.f32 %v545, %v636
  %v639 = vmul.f32 %v546, %v636
  %v640 = vmul.f32 %v547, %v636
  %v641 = vmul.f32 %v548, %v636
  %v642 = vmul.f32 %v549, %v636
  %v643 = vmul.f32 %v550, %v636
  %v644 = vmul.f32 %v551, %v636
  %v645 = vmul.f32 %v552, %v636
  %v646 = vmul.f32 %v553, %v636
  %v647 = vmul.f32 %v554, %v636
  %v648 = vmul.f32 %v555, %v636
  %v649 = vmul.f32 %v556, %v636
  %v650 = vmul.f32 %v557, %v636
  %v651 = vmul.f32 %v558, %v636
  %v652 = vmul.f32 %v559, %v636
  %v653 = vmul.f32 %v560, %v636
  %v655 = vlaneseq
  %v656 = vshrl.u32 %v655, 7
  %v657 = vsub.s32 0, %v656
  %v658 = vrot.slane %v631, %v657
  %v660 = vadd.f32 %v638, %v658
  %v661 = vadd.f32 %v639, %v658
  %v662 = vadd.f32 %v640, %v658
  %v663 = vadd.f32 %v641, %v658
  %v664 = vadd.f32 %v642, %v658
  %v665 = vadd.f32 %v643, %v658
  %v666 = vadd.f32 %v644, %v658
  %v667 = vadd.f32 %v645, %v658
  %v668 = vadd.f32 %v646, %v658
  %v669 = vadd.f32 %v647, %v658
  %v670 = vadd.f32 %v648, %v658
  %v671 = vadd.f32 %v649, %v658
  %v672 = vadd.f32 %v650, %v658
  %v673 = vadd.f32 %v651, %v658
  %v674 = vadd.f32 %v652, %v658
  %v675 = vadd.f32 %v653, %v658
  %vm676 = vcmp.ge.f32.partialorder %v660, 0.0
  %vm677 = vcmp.ge.f32.partialorder %v661, 0.0
  %vm678 = vcmp.ge.f32.partialorder %v662, 0.0
  %vm679 = vcmp.ge.f32.partialorder %v663, 0.0
  %vm680 = vcmp.ge.f32.partialorder %v664, 0.0
  %vm681 = vcmp.ge.f32.partialorder %v665, 0.0
  %vm682 = vcmp.ge.f32.partialorder %v666, 0.0
  %vm683 = vcmp.ge.f32.partialorder %v667, 0.0
  %vm684 = vcmp.ge.f32.partialorder %v668, 0.0
  %vm685 = vcmp.ge.f32.partialorder %v669, 0.0
  %vm686 = vcmp.ge.f32.partialorder %v670, 0.0
  %vm687 = vcmp.ge.f32.partialorder %v671, 0.0
  %vm688 = vcmp.ge.f32.partialorder %v672, 0.0
  %vm689 = vcmp.ge.f32.partialorder %v673, 0.0
  %vm690 = vcmp.ge.f32.partialorder %v674, 0.0
  %vm691 = vcmp.ge.f32.partialorder %v675, 0.0
  %v692 = vmul.f32 %v660, 0.2
  %v693 = vmul.f32 %v661, 0.2
  %v694 = vmul.f32 %v662, 0.2
  %v695 = vmul.f32 %v663, 0.2
  %v696 = vmul.f32 %v664, 0.2
  %v697 = vmul.f32 %v665, 0.2
  %v698 = vmul.f32 %v666, 0.2
  %v699 = vmul.f32 %v667, 0.2
  %v700 = vmul.f32 %v668, 0.2
  %v701 = vmul.f32 %v669, 0.2
  %v702 = vmul.f32 %v670, 0.2
  %v703 = vmul.f32 %v671, 0.2
  %v704 = vmul.f32 %v672, 0.2
  %v705 = vmul.f32 %v673, 0.2
  %v706 = vmul.f32 %v674, 0.2
  %v707 = vmul.f32 %v675, 0.2
  %v708 = vsel %vm676, %v660, %v692
  %v709 = vsel %vm677, %v661, %v693
  %v710 = vsel %vm678, %v662, %v694
  %v711 = vsel %vm679, %v663, %v695
  %v712 = vsel %vm680, %v664, %v696
  %v713 = vsel %vm681, %v665, %v697
  %v714 = vsel %vm682, %v666, %v698
  %v715 = vsel %vm683, %v667, %v699
  %v716 = vsel %vm684, %v668, %v700
  %v717 = vsel %vm685, %v669, %v701
  %v718 = vsel %vm686, %v670, %v702
  %v719 = vsel %vm687, %v671, %v703
  %v720 = vsel %vm688, %v672, %v704
  %v721 = vsel %vm689, %v673, %v705
  %v722 = vsel %vm690, %v674, %v706
  %v723 = vsel %vm691, %v675, %v707
  %v724 = vpack.c.bf16 %v709, %v708
  %v725 = vpack.c.bf16 %v711, %v710
  %v726 = vpack.c.bf16 %v713, %v712
  %v727 = vpack.c.bf16 %v715, %v714
  %v728 = vpack.c.bf16 %v717, %v716
  %v729 = vpack.c.bf16 %v719, %v718
  %v730 = vpack.c.bf16 %v721, %v720
  %v731 = vpack.c.bf16 %v723, %v722
  %v732 = vld [vmem:[%s8] sm:$0xf]
  %v733 = vld [vmem:[%s8 + $0x4] sm:$0xf]
  %v734 = vld [vmem:[%s8 + $0x8] sm:$0xf]
  %v735 = vld [vmem:[%s8 + $0xc] sm:$0xf]
  %v736 = vld [vmem:[%s8 + $0x10] sm:$0xf]
  %v737 = vld [vmem:[%s8 + $0x14] sm:$0xf]
  %v738 = vld [vmem:[%s8 + $0x18] sm:$0xf]
  %v739 = vld [vmem:[%s8 + $0x1c] sm:$0xf]
  %v740 = vld [vmem:[%s8 + $0x20] sm:$0xf]
  %v741 = vld [vmem:[%s8 + $0x24] sm:$0xf]
  %v742 = vld [vmem:[%s8 + $0x28] sm:$0xf]
  %v743 = vld [vmem:[%s8 + $0x2c] sm:$0xf]
  %v744 = vld [vmem:[%s8 + $0x30] sm:$0xf]
  %v745 = vld [vmem:[%s8 + $0x34] sm:$0xf]
  %v746 = vld [vmem:[%s8 + $0x38] sm:$0xf]
  %v747 = vld [vmem:[%s8 + $0x3c] sm:$0xf]
  %v764 = vunpack.c.l.b16 %v732
  %v765 = vunpack.c.l.b16 %v733
  %v766 = vunpack.c.l.b16 %v734
  %v767 = vunpack.c.l.b16 %v735
  %v768 = vunpack.c.l.b16 %v736
  %v769 = vunpack.c.l.b16 %v737
  %v770 = vunpack.c.l.b16 %v738
  %v771 = vunpack.c.l.b16 %v739
  %v772 = vunpack.c.l.b16 %v740
  %v773 = vunpack.c.l.b16 %v741
  %v774 = vunpack.c.l.b16 %v742
  %v775 = vunpack.c.l.b16 %v743
  %v776 = vunpack.c.l.b16 %v744
  %v777 = vunpack.c.l.b16 %v745
  %v778 = vunpack.c.l.b16 %v746
  %v779 = vunpack.c.l.b16 %v747
  %v780 = vpack.c.b16 %v765, %v764
  %v781 = vpack.c.b16 %v767, %v766
  %v782 = vpack.c.b16 %v769, %v768
  %v783 = vpack.c.b16 %v771, %v770
  %v784 = vpack.c.b16 %v773, %v772
  %v785 = vpack.c.b16 %v775, %v774
  %v786 = vpack.c.b16 %v777, %v776
  %v787 = vpack.c.b16 %v779, %v778
  %796 = vmatprep.subr.bf16.mxu0 0
  %797 = vmatpush1.bf16.msra.mxu0 %v787
  %798 = vmatprep.subr.bf16.mxu0 0
  %799 = vmatpush1.bf16.msra.mxu0 %v786
  %800 = vmatprep.subr.bf16.mxu0 0
  %801 = vmatpush1.bf16.msra.mxu0 %v785
  %802 = vmatprep.subr.bf16.mxu0 0
  %803 = vmatpush1.bf16.msra.mxu0 %v784
  %804 = vmatprep.subr.bf16.mxu0 0
  %805 = vmatpush1.bf16.msra.mxu0 %v783
  %806 = vmatprep.subr.bf16.mxu0 0
  %807 = vmatpush1.bf16.msra.mxu0 %v782
  %808 = vmatprep.subr.bf16.mxu0 0
  %809 = vmatpush1.bf16.msra.mxu0 %v781
  %810 = vmatprep.subr.bf16.mxu0 0
  %811 = vmatpush1.bf16.msra.mxu0 %v780
  %812 = vmatprep.subr.bf16.mxu0 0
  %813 = vmatpush2.bf16.msra.mxu0 0
  %814 = vmatprep.subr.bf16.mxu0 0
  %815 = vmatpush2.bf16.msra.mxu0 0
  %816 = vmatprep.subr.bf16.mxu0 0
  %817 = vmatpush2.bf16.msra.mxu0 0
  %818 = vmatprep.subr.bf16.mxu0 0
  %819 = vmatpush2.bf16.msra.mxu0 0
  %820 = vmatprep.subr.bf16.mxu0 0
  %821 = vmatpush2.bf16.msra.mxu0 0
  %822 = vmatprep.subr.bf16.mxu0 0
  %823 = vmatpush2.bf16.msra.mxu0 0
  %824 = vmatprep.subr.bf16.mxu0 0
  %825 = vmatpush2.bf16.msra.mxu0 0
  %826 = vmatprep.subr.bf16.mxu0 0
  %827 = vmatpush2.bf16.msra.mxu0 0
  %828 = vmatprep.mubr.bf16.mxu0 0
  %829 = vmatmul.mubr.bf16.gmra.mxu0 %v724
  %v830 = vpop.f32.mrf.mxu0
  %v831 = vadd.f32 0.0, %v830
  %v832 = vpop.f32.mrf.mxu0
  %v833 = vpop.f32.mrf.mxu0
  %v834 = vadd.f32 0.0, %v833
  %v835 = vpop.f32.mrf.mxu0
  %836 = vmatprep.mubr.bf16.mxu0 0
  %837 = vmatmul.mubr.bf16.gmra.mxu0 %v725
  %v838 = vpop.f32.mrf.mxu0
  %v839 = vadd.f32 0.0, %v838
  %v840 = vpop.f32.mrf.mxu0
  %v841 = vpop.f32.mrf.mxu0
  %v842 = vadd.f32 0.0, %v841
  %v843 = vpop.f32.mrf.mxu0
  %844 = vmatprep.mubr.bf16.mxu0 0
  %845 = vmatmul.mubr.bf16.gmra.mxu0 %v726
  %v846 = vpop.f32.mrf.mxu0
  %v847 = vadd.f32 0.0, %v846
  %v848 = vpop.f32.mrf.mxu0
  %v849 = vpop.f32.mrf.mxu0
  %v850 = vadd.f32 0.0, %v849
  %v851 = vpop.f32.mrf.mxu0
  %852 = vmatprep.mubr.bf16.mxu0 0
  %853 = vmatmul.mubr.bf16.gmra.mxu0 %v727
  %v854 = vpop.f32.mrf.mxu0
  %v855 = vadd.f32 0.0, %v854
  %v856 = vpop.f32.mrf.mxu0
  %v857 = vpop.f32.mrf.mxu0
  %v858 = vadd.f32 0.0, %v857
  %v859 = vpop.f32.mrf.mxu0
  %860 = vmatprep.mubr.bf16.mxu0 0
  %861 = vmatmul.mubr.bf16.gmra.mxu0 %v728
  %v862 = vpop.f32.mrf.mxu0
  %v863 = vadd.f32 0.0, %v862
  %v864 = vpop.f32.mrf.mxu0
  %v865 = vpop.f32.mrf.mxu0
  %v866 = vadd.f32 0.0, %v865
  %v867 = vpop.f32.mrf.mxu0
  %868 = vmatprep.mubr.bf16.mxu0 0
  %869 = vmatmul.mubr.bf16.gmra.mxu0 %v729
  %v870 = vpop.f32.mrf.mxu0
  %v871 = vadd.f32 0.0, %v870
  %v872 = vpop.f32.mrf.mxu0
  %v873 = vpop.f32.mrf.mxu0
  %v874 = vadd.f32 0.0, %v873
  %v875 = vpop.f32.mrf.mxu0
  %876 = vmatprep.mubr.bf16.mxu0 0
  %877 = vmatmul.mubr.bf16.gmra.mxu0 %v730
  %v878 = vpop.f32.mrf.mxu0
  %v879 = vadd.f32 0.0, %v878
  %v880 = vpop.f32.mrf.mxu0
  %v881 = vpop.f32.mrf.mxu0
  %v882 = vadd.f32 0.0, %v881
  %v883 = vpop.f32.mrf.mxu0
  %884 = vmatprep.mubr.bf16.mxu0 0
  %885 = vmatmul.mubr.bf16.gmra.mxu0 %v731
  %v886 = vpop.f32.mrf.mxu0
  %v887 = vadd.f32 0.0, %v886
  %v888 = vpop.f32.mrf.mxu0
  %v889 = vpop.f32.mrf.mxu0
  %v890 = vadd.f32 0.0, %v889
  %v891 = vpop.f32.mrf.mxu0
  %892 = vdwg.mxu0
  %v893 = vld [vmem:[%s9] sm:$0x1]
  %v894 = vld [vmem:[%s10] sm:$0x1]
  %v895 = vadd.f32 %v831, %v834
  %v896 = vadd.f32 %v895, %v839
  %v897 = vadd.f32 %v896, %v842
  %v898 = vadd.f32 %v897, %v847
  %v899 = vadd.f32 %v898, %v850
  %v900 = vadd.f32 %v899, %v855
  %v901 = vadd.f32 %v900, %v858
  %v902 = vadd.f32 %v901, %v863
  %v903 = vadd.f32 %v902, %v866
  %v904 = vadd.f32 %v903, %v871
  %v905 = vadd.f32 %v904, %v874
  %v906 = vadd.f32 %v905, %v879
  %v907 = vadd.f32 %v906, %v882
  %v908 = vadd.f32 %v907, %v887
  %v909 = vadd.f32 %v908, %v890
  %v910 = vrot.slane %v909, 4
  %v911 = vadd.f32 %v909, %v910
  %v912 = vrot.slane %v911, 2
  %v913 = vadd.f32 %v911, %v912
  %v914 = vrot.slane %v913, 1
  %v915 = vadd.f32 %v913, %v914
  %v916 = vmul.f32 %v915, %v584
  %v917 = vmul.f32 %v831, %v831
  %v918 = vmul.f32 %v834, %v834
  %v919 = vmul.f32 %v839, %v839
  %v920 = vmul.f32 %v842, %v842
  %v921 = vmul.f32 %v847, %v847
  %v922 = vmul.f32 %v850, %v850
  %v923 = vmul.f32 %v855, %v855
  %v924 = vmul.f32 %v858, %v858
  %v925 = vmul.f32 %v863, %v863
  %v926 = vmul.f32 %v866, %v866
  %v927 = vmul.f32 %v871, %v871
  %v928 = vmul.f32 %v874, %v874
  %v929 = vmul.f32 %v879, %v879
  %v930 = vmul.f32 %v882, %v882
  %v931 = vmul.f32 %v887, %v887
  %v932 = vmul.f32 %v890, %v890
  %v933 = vadd.f32 %v917, %v918
  %v934 = vadd.f32 %v933, %v919
  %v935 = vadd.f32 %v934, %v920
  %v936 = vadd.f32 %v935, %v921
  %v937 = vadd.f32 %v936, %v922
  %v938 = vadd.f32 %v937, %v923
  %v939 = vadd.f32 %v938, %v924
  %v940 = vadd.f32 %v939, %v925
  %v941 = vadd.f32 %v940, %v926
  %v942 = vadd.f32 %v941, %v927
  %v943 = vadd.f32 %v942, %v928
  %v944 = vadd.f32 %v943, %v929
  %v945 = vadd.f32 %v944, %v930
  %v946 = vadd.f32 %v945, %v931
  %v947 = vadd.f32 %v946, %v932
  %v948 = vrot.slane %v947, 4
  %v949 = vadd.f32 %v947, %v948
  %v950 = vrot.slane %v949, 2
  %v951 = vadd.f32 %v949, %v950
  %v952 = vrot.slane %v951, 1
  %v953 = vadd.f32 %v951, %v952
  %v954 = vmul.f32 %v953, %v584
  %v955 = vmul.f32 %v916, %v916
  %v956 = vsub.f32 %v954, %v955
  %v957 = vmax.f32 %v956, 0.0
  %v958 = vadd.f32 %v957, 1e-05
  %v959 = vrsqrt.pop %v958
  %v960 = vmul.f32 %v893, %v959
  %v961 = vmul.f32 %v916, %v960
  %v962 = vsub.f32 %v894, %v961
  %v964 = vlaneseq
  %v965 = vshrl.u32 %v964, 7
  %v966 = vsub.s32 0, %v965
  %v967 = vrot.slane %v960, %v966
  %v969 = vmul.f32 %v831, %v967
  %v970 = vmul.f32 %v834, %v967
  %v971 = vmul.f32 %v839, %v967
  %v972 = vmul.f32 %v842, %v967
  %v973 = vmul.f32 %v847, %v967
  %v974 = vmul.f32 %v850, %v967
  %v975 = vmul.f32 %v855, %v967
  %v976 = vmul.f32 %v858, %v967
  %v977 = vmul.f32 %v863, %v967
  %v978 = vmul.f32 %v866, %v967
  %v979 = vmul.f32 %v871, %v967
  %v980 = vmul.f32 %v874, %v967
  %v981 = vmul.f32 %v879, %v967
  %v982 = vmul.f32 %v882, %v967
  %v983 = vmul.f32 %v887, %v967
  %v984 = vmul.f32 %v890, %v967
  %v986 = vlaneseq
  %v987 = vshrl.u32 %v986, 7
  %v988 = vsub.s32 0, %v987
  %v989 = vrot.slane %v962, %v988
  %v991 = vadd.f32 %v969, %v989
  %v992 = vadd.f32 %v970, %v989
  %v993 = vadd.f32 %v971, %v989
  %v994 = vadd.f32 %v972, %v989
  %v995 = vadd.f32 %v973, %v989
  %v996 = vadd.f32 %v974, %v989
  %v997 = vadd.f32 %v975, %v989
  %v998 = vadd.f32 %v976, %v989
  %v999 = vadd.f32 %v977, %v989
  %v1000 = vadd.f32 %v978, %v989
  %v1001 = vadd.f32 %v979, %v989
  %v1002 = vadd.f32 %v980, %v989
  %v1003 = vadd.f32 %v981, %v989
  %v1004 = vadd.f32 %v982, %v989
  %v1005 = vadd.f32 %v983, %v989
  %v1006 = vadd.f32 %v984, %v989
  %vm1007 = vcmp.ge.f32.partialorder %v991, 0.0
  %vm1008 = vcmp.ge.f32.partialorder %v992, 0.0
  %vm1009 = vcmp.ge.f32.partialorder %v993, 0.0
  %vm1010 = vcmp.ge.f32.partialorder %v994, 0.0
  %vm1011 = vcmp.ge.f32.partialorder %v995, 0.0
  %vm1012 = vcmp.ge.f32.partialorder %v996, 0.0
  %vm1013 = vcmp.ge.f32.partialorder %v997, 0.0
  %vm1014 = vcmp.ge.f32.partialorder %v998, 0.0
  %vm1015 = vcmp.ge.f32.partialorder %v999, 0.0
  %vm1016 = vcmp.ge.f32.partialorder %v1000, 0.0
  %vm1017 = vcmp.ge.f32.partialorder %v1001, 0.0
  %vm1018 = vcmp.ge.f32.partialorder %v1002, 0.0
  %vm1019 = vcmp.ge.f32.partialorder %v1003, 0.0
  %vm1020 = vcmp.ge.f32.partialorder %v1004, 0.0
  %vm1021 = vcmp.ge.f32.partialorder %v1005, 0.0
  %vm1022 = vcmp.ge.f32.partialorder %v1006, 0.0
  %v1023 = vmul.f32 %v991, 0.2
  %v1024 = vmul.f32 %v992, 0.2
  %v1025 = vmul.f32 %v993, 0.2
  %v1026 = vmul.f32 %v994, 0.2
  %v1027 = vmul.f32 %v995, 0.2
  %v1028 = vmul.f32 %v996, 0.2
  %v1029 = vmul.f32 %v997, 0.2
  %v1030 = vmul.f32 %v998, 0.2
  %v1031 = vmul.f32 %v999, 0.2
  %v1032 = vmul.f32 %v1000, 0.2
  %v1033 = vmul.f32 %v1001, 0.2
  %v1034 = vmul.f32 %v1002, 0.2
  %v1035 = vmul.f32 %v1003, 0.2
  %v1036 = vmul.f32 %v1004, 0.2
  %v1037 = vmul.f32 %v1005, 0.2
  %v1038 = vmul.f32 %v1006, 0.2
  %v1039 = vsel %vm1007, %v991, %v1023
  %v1040 = vsel %vm1008, %v992, %v1024
  %v1041 = vsel %vm1009, %v993, %v1025
  %v1042 = vsel %vm1010, %v994, %v1026
  %v1043 = vsel %vm1011, %v995, %v1027
  %v1044 = vsel %vm1012, %v996, %v1028
  %v1045 = vsel %vm1013, %v997, %v1029
  %v1046 = vsel %vm1014, %v998, %v1030
  %v1047 = vsel %vm1015, %v999, %v1031
  %v1048 = vsel %vm1016, %v1000, %v1032
  %v1049 = vsel %vm1017, %v1001, %v1033
  %v1050 = vsel %vm1018, %v1002, %v1034
  %v1051 = vsel %vm1019, %v1003, %v1035
  %v1052 = vsel %vm1020, %v1004, %v1036
  %v1053 = vsel %vm1021, %v1005, %v1037
  %v1054 = vsel %vm1022, %v1006, %v1038
  %v1055 = vadd.f32 %v1039, %v708
  %v1056 = vadd.f32 %v1040, %v709
  %v1057 = vadd.f32 %v1041, %v710
  %v1058 = vadd.f32 %v1042, %v711
  %v1059 = vadd.f32 %v1043, %v712
  %v1060 = vadd.f32 %v1044, %v713
  %v1061 = vadd.f32 %v1045, %v714
  %v1062 = vadd.f32 %v1046, %v715
  %v1063 = vadd.f32 %v1047, %v716
  %v1064 = vadd.f32 %v1048, %v717
  %v1065 = vadd.f32 %v1049, %v718
  %v1066 = vadd.f32 %v1050, %v719
  %v1067 = vadd.f32 %v1051, %v720
  %v1068 = vadd.f32 %v1052, %v721
  %v1069 = vadd.f32 %v1053, %v722
  %v1070 = vadd.f32 %v1054, %v723
  %v1071 = vpack.c.bf16 %v1056, %v1055
  %v1072 = vpack.c.bf16 %v1058, %v1057
  %v1073 = vpack.c.bf16 %v1060, %v1059
  %v1074 = vpack.c.bf16 %v1062, %v1061
  %v1075 = vpack.c.bf16 %v1064, %v1063
  %v1076 = vpack.c.bf16 %v1066, %v1065
  %v1077 = vpack.c.bf16 %v1068, %v1067
  %v1078 = vpack.c.bf16 %v1070, %v1069
  %v1079 = vld [vmem:[%s11] sm:$0xf]
  %v1080 = vld [vmem:[%s11 + $0x4] sm:$0xf]
  %v1081 = vld [vmem:[%s11 + $0x8] sm:$0xf]
  %v1082 = vld [vmem:[%s11 + $0xc] sm:$0xf]
  %v1083 = vld [vmem:[%s11 + $0x10] sm:$0xf]
  %v1084 = vld [vmem:[%s11 + $0x14] sm:$0xf]
  %v1085 = vld [vmem:[%s11 + $0x18] sm:$0xf]
  %v1086 = vld [vmem:[%s11 + $0x1c] sm:$0xf]
  %v1087 = vld [vmem:[%s11 + $0x20] sm:$0xf]
  %v1088 = vld [vmem:[%s11 + $0x24] sm:$0xf]
  %v1089 = vld [vmem:[%s11 + $0x28] sm:$0xf]
  %v1090 = vld [vmem:[%s11 + $0x2c] sm:$0xf]
  %v1091 = vld [vmem:[%s11 + $0x30] sm:$0xf]
  %v1092 = vld [vmem:[%s11 + $0x34] sm:$0xf]
  %v1093 = vld [vmem:[%s11 + $0x38] sm:$0xf]
  %v1094 = vld [vmem:[%s11 + $0x3c] sm:$0xf]
  %v1095 = vld [vmem:[%s12] sm:$0x1]
  %v1097 = vlaneseq
  %v1098 = vshrl.u32 %v1097, 7
  %v1099 = vsub.s32 0, %v1098
  %v1100 = vrot.slane %v1095, %v1099
  %v1118 = vunpack.c.l.b16 %v1079
  %v1119 = vunpack.c.l.b16 %v1080
  %v1120 = vunpack.c.l.b16 %v1081
  %v1121 = vunpack.c.l.b16 %v1082
  %v1122 = vunpack.c.l.b16 %v1083
  %v1123 = vunpack.c.l.b16 %v1084
  %v1124 = vunpack.c.l.b16 %v1085
  %v1125 = vunpack.c.l.b16 %v1086
  %v1126 = vunpack.c.l.b16 %v1087
  %v1127 = vunpack.c.l.b16 %v1088
  %v1128 = vunpack.c.l.b16 %v1089
  %v1129 = vunpack.c.l.b16 %v1090
  %v1130 = vunpack.c.l.b16 %v1091
  %v1131 = vunpack.c.l.b16 %v1092
  %v1132 = vunpack.c.l.b16 %v1093
  %v1133 = vunpack.c.l.b16 %v1094
  %v1134 = vpack.c.b16 %v1119, %v1118
  %v1135 = vpack.c.b16 %v1121, %v1120
  %v1136 = vpack.c.b16 %v1123, %v1122
  %v1137 = vpack.c.b16 %v1125, %v1124
  %v1138 = vpack.c.b16 %v1127, %v1126
  %v1139 = vpack.c.b16 %v1129, %v1128
  %v1140 = vpack.c.b16 %v1131, %v1130
  %v1141 = vpack.c.b16 %v1133, %v1132
  %1150 = vmatprep.subr.bf16.mxu0 0
  %1151 = vmatpush1.bf16.msra.mxu0 %v1141
  %1152 = vmatprep.subr.bf16.mxu0 0
  %1153 = vmatpush1.bf16.msra.mxu0 %v1140
  %1154 = vmatprep.subr.bf16.mxu0 0
  %1155 = vmatpush1.bf16.msra.mxu0 %v1139
  %1156 = vmatprep.subr.bf16.mxu0 0
  %1157 = vmatpush1.bf16.msra.mxu0 %v1138
  %1158 = vmatprep.subr.bf16.mxu0 0
  %1159 = vmatpush1.bf16.msra.mxu0 %v1137
  %1160 = vmatprep.subr.bf16.mxu0 0
  %1161 = vmatpush1.bf16.msra.mxu0 %v1136
  %1162 = vmatprep.subr.bf16.mxu0 0
  %1163 = vmatpush1.bf16.msra.mxu0 %v1135
  %1164 = vmatprep.subr.bf16.mxu0 0
  %1165 = vmatpush1.bf16.msra.mxu0 %v1134
  %1166 = vmatprep.subr.bf16.mxu0 0
  %1167 = vmatpush2.bf16.msra.mxu0 0
  %1168 = vmatprep.subr.bf16.mxu0 0
  %1169 = vmatpush2.bf16.msra.mxu0 0
  %1170 = vmatprep.subr.bf16.mxu0 0
  %1171 = vmatpush2.bf16.msra.mxu0 0
  %1172 = vmatprep.subr.bf16.mxu0 0
  %1173 = vmatpush2.bf16.msra.mxu0 0
  %1174 = vmatprep.subr.bf16.mxu0 0
  %1175 = vmatpush2.bf16.msra.mxu0 0
  %1176 = vmatprep.subr.bf16.mxu0 0
  %1177 = vmatpush2.bf16.msra.mxu0 0
  %1178 = vmatprep.subr.bf16.mxu0 0
  %1179 = vmatpush2.bf16.msra.mxu0 0
  %1180 = vmatprep.subr.bf16.mxu0 0
  %1181 = vmatpush2.bf16.msra.mxu0 0
  %1182 = vmatprep.mubr.bf16.mxu0 0
  %1183 = vmatmul.mubr.bf16.gmra.mxu0 %v1071
  %v1184 = vpop.f32.mrf.mxu0
  %v1185 = vadd.f32 %v1100, %v1184
  %v1186 = vpop.f32.mrf.mxu0
  %v1187 = vpop.f32.mrf.mxu0
  %v1188 = vadd.f32 %v1100, %v1187
  %v1189 = vpop.f32.mrf.mxu0
  %1190 = vmatprep.mubr.bf16.mxu0 0
  %1191 = vmatmul.mubr.bf16.gmra.mxu0 %v1072
  %v1192 = vpop.f32.mrf.mxu0
  %v1193 = vadd.f32 %v1100, %v1192
  %v1194 = vpop.f32.mrf.mxu0
  %v1195 = vpop.f32.mrf.mxu0
  %v1196 = vadd.f32 %v1100, %v1195
  %v1197 = vpop.f32.mrf.mxu0
  %1198 = vmatprep.mubr.bf16.mxu0 0
  %1199 = vmatmul.mubr.bf16.gmra.mxu0 %v1073
  %v1200 = vpop.f32.mrf.mxu0
  %v1201 = vadd.f32 %v1100, %v1200
  %v1202 = vpop.f32.mrf.mxu0
  %v1203 = vpop.f32.mrf.mxu0
  %v1204 = vadd.f32 %v1100, %v1203
  %v1205 = vpop.f32.mrf.mxu0
  %1206 = vmatprep.mubr.bf16.mxu0 0
  %1207 = vmatmul.mubr.bf16.gmra.mxu0 %v1074
  %v1208 = vpop.f32.mrf.mxu0
  %v1209 = vadd.f32 %v1100, %v1208
  %v1210 = vpop.f32.mrf.mxu0
  %v1211 = vpop.f32.mrf.mxu0
  %v1212 = vadd.f32 %v1100, %v1211
  %v1213 = vpop.f32.mrf.mxu0
  %1214 = vmatprep.mubr.bf16.mxu0 0
  %1215 = vmatmul.mubr.bf16.gmra.mxu0 %v1075
  %v1216 = vpop.f32.mrf.mxu0
  %v1217 = vadd.f32 %v1100, %v1216
  %v1218 = vpop.f32.mrf.mxu0
  %v1219 = vpop.f32.mrf.mxu0
  %v1220 = vadd.f32 %v1100, %v1219
  %v1221 = vpop.f32.mrf.mxu0
  %1222 = vmatprep.mubr.bf16.mxu0 0
  %1223 = vmatmul.mubr.bf16.gmra.mxu0 %v1076
  %v1224 = vpop.f32.mrf.mxu0
  %v1225 = vadd.f32 %v1100, %v1224
  %v1226 = vpop.f32.mrf.mxu0
  %v1227 = vpop.f32.mrf.mxu0
  %v1228 = vadd.f32 %v1100, %v1227
  %v1229 = vpop.f32.mrf.mxu0
  %1230 = vmatprep.mubr.bf16.mxu0 0
  %1231 = vmatmul.mubr.bf16.gmra.mxu0 %v1077
  %v1232 = vpop.f32.mrf.mxu0
  %v1233 = vadd.f32 %v1100, %v1232
  %v1234 = vpop.f32.mrf.mxu0
  %v1235 = vpop.f32.mrf.mxu0
  %v1236 = vadd.f32 %v1100, %v1235
  %v1237 = vpop.f32.mrf.mxu0
  %1238 = vmatprep.mubr.bf16.mxu0 0
  %1239 = vmatmul.mubr.bf16.gmra.mxu0 %v1078
  %v1240 = vpop.f32.mrf.mxu0
  %v1241 = vadd.f32 %v1100, %v1240
  %v1242 = vpop.f32.mrf.mxu0
  %v1243 = vpop.f32.mrf.mxu0
  %v1244 = vadd.f32 %v1100, %v1243
  %v1245 = vpop.f32.mrf.mxu0
  %1246 = vdwg.mxu0
  %vm1247 = vcmp.ge.f32.partialorder %v1185, 0.0
  %vm1248 = vcmp.ge.f32.partialorder %v1188, 0.0
  %vm1249 = vcmp.ge.f32.partialorder %v1193, 0.0
  %vm1250 = vcmp.ge.f32.partialorder %v1196, 0.0
  %vm1251 = vcmp.ge.f32.partialorder %v1201, 0.0
  %vm1252 = vcmp.ge.f32.partialorder %v1204, 0.0
  %vm1253 = vcmp.ge.f32.partialorder %v1209, 0.0
  %vm1254 = vcmp.ge.f32.partialorder %v1212, 0.0
  %vm1255 = vcmp.ge.f32.partialorder %v1217, 0.0
  %vm1256 = vcmp.ge.f32.partialorder %v1220, 0.0
  %vm1257 = vcmp.ge.f32.partialorder %v1225, 0.0
  %vm1258 = vcmp.ge.f32.partialorder %v1228, 0.0
  %vm1259 = vcmp.ge.f32.partialorder %v1233, 0.0
  %vm1260 = vcmp.ge.f32.partialorder %v1236, 0.0
  %vm1261 = vcmp.ge.f32.partialorder %v1241, 0.0
  %vm1262 = vcmp.ge.f32.partialorder %v1244, 0.0
  %v1263 = vmul.f32 %v1185, 0.2
  %v1264 = vmul.f32 %v1188, 0.2
  %v1265 = vmul.f32 %v1193, 0.2
  %v1266 = vmul.f32 %v1196, 0.2
  %v1267 = vmul.f32 %v1201, 0.2
  %v1268 = vmul.f32 %v1204, 0.2
  %v1269 = vmul.f32 %v1209, 0.2
  %v1270 = vmul.f32 %v1212, 0.2
  %v1271 = vmul.f32 %v1217, 0.2
  %v1272 = vmul.f32 %v1220, 0.2
  %v1273 = vmul.f32 %v1225, 0.2
  %v1274 = vmul.f32 %v1228, 0.2
  %v1275 = vmul.f32 %v1233, 0.2
  %v1276 = vmul.f32 %v1236, 0.2
  %v1277 = vmul.f32 %v1241, 0.2
  %v1278 = vmul.f32 %v1244, 0.2
  %v1279 = vsel %vm1247, %v1185, %v1263
  %v1280 = vsel %vm1248, %v1188, %v1264
  %v1281 = vsel %vm1249, %v1193, %v1265
  %v1282 = vsel %vm1250, %v1196, %v1266
  %v1283 = vsel %vm1251, %v1201, %v1267
  %v1284 = vsel %vm1252, %v1204, %v1268
  %v1285 = vsel %vm1253, %v1209, %v1269
  %v1286 = vsel %vm1254, %v1212, %v1270
  %v1287 = vsel %vm1255, %v1217, %v1271
  %v1288 = vsel %vm1256, %v1220, %v1272
  %v1289 = vsel %vm1257, %v1225, %v1273
  %v1290 = vsel %vm1258, %v1228, %v1274
  %v1291 = vsel %vm1259, %v1233, %v1275
  %v1292 = vsel %vm1260, %v1236, %v1276
  %v1293 = vsel %vm1261, %v1241, %v1277
  %v1294 = vsel %vm1262, %v1244, %v1278
  %v1295 = vld [vmem:[%s13] sm:$0x1]
  %v1297 = vlaneseq
  %v1298 = vshrl.u32 %v1297, 7
  %v1299 = vsub.s32 0, %v1298
  %v1300 = vrot.slane %v1295, %v1299
  %v1302 = vmul.f32 %v1279, %v1300
  %v1303 = vmul.f32 %v1280, %v1300
  %v1304 = vmul.f32 %v1281, %v1300
  %v1305 = vmul.f32 %v1282, %v1300
  %v1306 = vmul.f32 %v1283, %v1300
  %v1307 = vmul.f32 %v1284, %v1300
  %v1308 = vmul.f32 %v1285, %v1300
  %v1309 = vmul.f32 %v1286, %v1300
  %v1310 = vmul.f32 %v1287, %v1300
  %v1311 = vmul.f32 %v1288, %v1300
  %v1312 = vmul.f32 %v1289, %v1300
  %v1313 = vmul.f32 %v1290, %v1300
  %v1314 = vmul.f32 %v1291, %v1300
  %v1315 = vmul.f32 %v1292, %v1300
  %v1316 = vmul.f32 %v1293, %v1300
  %v1317 = vmul.f32 %v1294, %v1300
  %1318 = vadd.xlane.f32.xlu0 %v1302
  %v1319 = vpop.xlane.xlu0 %1318
  %1320 = vadd.xlane.f32.xlu0 %v1303
  %v1321 = vpop.xlane.xlu0 %1320
  %1322 = vadd.xlane.f32.xlu0 %v1304
  %v1323 = vpop.xlane.xlu0 %1322
  %1324 = vadd.xlane.f32.xlu0 %v1305
  %v1325 = vpop.xlane.xlu0 %1324
  %1326 = vadd.xlane.f32.xlu0 %v1306
  %v1327 = vpop.xlane.xlu0 %1326
  %1328 = vadd.xlane.f32.xlu0 %v1307
  %v1329 = vpop.xlane.xlu0 %1328
  %1330 = vadd.xlane.f32.xlu0 %v1308
  %v1331 = vpop.xlane.xlu0 %1330
  %1332 = vadd.xlane.f32.xlu0 %v1309
  %v1333 = vpop.xlane.xlu0 %1332
  %1334 = vadd.xlane.f32.xlu0 %v1310
  %v1335 = vpop.xlane.xlu0 %1334
  %1336 = vadd.xlane.f32.xlu0 %v1311
  %v1337 = vpop.xlane.xlu0 %1336
  %1338 = vadd.xlane.f32.xlu0 %v1312
  %v1339 = vpop.xlane.xlu0 %1338
  %1340 = vadd.xlane.f32.xlu0 %v1313
  %v1341 = vpop.xlane.xlu0 %1340
  %1342 = vadd.xlane.f32.xlu0 %v1314
  %v1343 = vpop.xlane.xlu0 %1342
  %1344 = vadd.xlane.f32.xlu0 %v1315
  %v1345 = vpop.xlane.xlu0 %1344
  %1346 = vadd.xlane.f32.xlu0 %v1316
  %v1347 = vpop.xlane.xlu0 %1346
  %1348 = vadd.xlane.f32.xlu0 %v1317
  %v1349 = vpop.xlane.xlu0 %1348
  %v1350 = vld [vmem:[%s14] sm:$0x1]
  %v1352 = vlaneseq
  %v1353 = vshrl.u32 %v1352, 7
  %v1354 = vsub.s32 0, %v1353
  %v1355 = vrot.slane %v1350, %v1354
  %v1357 = vmul.f32 %v61, %v1355
  %v1358 = vmul.f32 %v62, %v1355
  %v1359 = vmul.f32 %v63, %v1355
  %v1360 = vmul.f32 %v64, %v1355
  %v1361 = vmul.f32 %v65, %v1355
  %v1362 = vmul.f32 %v66, %v1355
  %v1363 = vmul.f32 %v67, %v1355
  %v1364 = vmul.f32 %v68, %v1355
  %v1365 = vmul.f32 %v69, %v1355
  %v1366 = vmul.f32 %v70, %v1355
  %v1367 = vmul.f32 %v71, %v1355
  %v1368 = vmul.f32 %v72, %v1355
  %v1369 = vmul.f32 %v73, %v1355
  %v1370 = vmul.f32 %v74, %v1355
  %v1371 = vmul.f32 %v75, %v1355
  %v1372 = vmul.f32 %v76, %v1355
  %v1373 = vld [vmem:[%s15] sm:$0x1]
  %v1375 = vlaneseq
  %v1376 = vshrl.u32 %v1375, 7
  %v1377 = vsub.s32 0, %v1376
  %v1378 = vrot.slane %v1373, %v1377
  %v1380 = vmul.f32 %v77, %v1378
  %v1381 = vmul.f32 %v78, %v1378
  %v1382 = vmul.f32 %v79, %v1378
  %v1383 = vmul.f32 %v80, %v1378
  %v1384 = vmul.f32 %v81, %v1378
  %v1385 = vmul.f32 %v82, %v1378
  %v1386 = vmul.f32 %v83, %v1378
  %v1387 = vmul.f32 %v84, %v1378
  %v1388 = vmul.f32 %v85, %v1378
  %v1389 = vmul.f32 %v86, %v1378
  %v1390 = vmul.f32 %v87, %v1378
  %v1391 = vmul.f32 %v88, %v1378
  %v1392 = vmul.f32 %v89, %v1378
  %v1393 = vmul.f32 %v90, %v1378
  %v1394 = vmul.f32 %v91, %v1378
  %v1395 = vmul.f32 %v92, %v1378
  %v1396 = vadd.f32 %v1357, %v1380
  %v1397 = vadd.f32 %v1358, %v1381
  %v1398 = vadd.f32 %v1359, %v1382
  %v1399 = vadd.f32 %v1360, %v1383
  %v1400 = vadd.f32 %v1361, %v1384
  %v1401 = vadd.f32 %v1362, %v1385
  %v1402 = vadd.f32 %v1363, %v1386
  %v1403 = vadd.f32 %v1364, %v1387
  %v1404 = vadd.f32 %v1365, %v1388
  %v1405 = vadd.f32 %v1366, %v1389
  %v1406 = vadd.f32 %v1367, %v1390
  %v1407 = vadd.f32 %v1368, %v1391
  %v1408 = vadd.f32 %v1369, %v1392
  %v1409 = vadd.f32 %v1370, %v1393
  %v1410 = vadd.f32 %v1371, %v1394
  %v1411 = vadd.f32 %v1372, %v1395
  %v1412 = vld [vmem:[%s16] sm:$0x1]
  %v1414 = vlaneseq
  %v1415 = vshrl.u32 %v1414, 7
  %v1416 = vsub.s32 0, %v1415
  %v1417 = vrot.slane %v1412, %v1416
  %v1419 = vmul.f32 %v93, %v1417
  %v1420 = vmul.f32 %v94, %v1417
  %v1421 = vmul.f32 %v95, %v1417
  %v1422 = vmul.f32 %v96, %v1417
  %v1423 = vmul.f32 %v97, %v1417
  %v1424 = vmul.f32 %v98, %v1417
  %v1425 = vmul.f32 %v99, %v1417
  %v1426 = vmul.f32 %v100, %v1417
  %v1427 = vmul.f32 %v101, %v1417
  %v1428 = vmul.f32 %v102, %v1417
  %v1429 = vmul.f32 %v103, %v1417
  %v1430 = vmul.f32 %v104, %v1417
  %v1431 = vmul.f32 %v105, %v1417
  %v1432 = vmul.f32 %v106, %v1417
  %v1433 = vmul.f32 %v107, %v1417
  %v1434 = vmul.f32 %v108, %v1417
  %v1435 = vadd.f32 %v1396, %v1419
  %v1436 = vadd.f32 %v1397, %v1420
  %v1437 = vadd.f32 %v1398, %v1421
  %v1438 = vadd.f32 %v1399, %v1422
  %v1439 = vadd.f32 %v1400, %v1423
  %v1440 = vadd.f32 %v1401, %v1424
  %v1441 = vadd.f32 %v1402, %v1425
  %v1442 = vadd.f32 %v1403, %v1426
  %v1443 = vadd.f32 %v1404, %v1427
  %v1444 = vadd.f32 %v1405, %v1428
  %v1445 = vadd.f32 %v1406, %v1429
  %v1446 = vadd.f32 %v1407, %v1430
  %v1447 = vadd.f32 %v1408, %v1431
  %v1448 = vadd.f32 %v1409, %v1432
  %v1449 = vadd.f32 %v1410, %v1433
  %v1450 = vadd.f32 %v1411, %v1434
  %v1451 = vsel %vm145, %v1435, 0.0
  %1452 = vadd.xlane.f32.xlu0 %v1451
  %v1453 = vpop.xlane.xlu0 %1452
  %v1454 = vsel %vm145, %v1436, 0.0
  %1455 = vadd.xlane.f32.xlu0 %v1454
  %v1456 = vpop.xlane.xlu0 %1455
  %v1457 = vsel %vm145, %v1437, 0.0
  %1458 = vadd.xlane.f32.xlu0 %v1457
  %v1459 = vpop.xlane.xlu0 %1458
  %v1460 = vsel %vm145, %v1438, 0.0
  %1461 = vadd.xlane.f32.xlu0 %v1460
  %v1462 = vpop.xlane.xlu0 %1461
  %v1463 = vsel %vm145, %v1439, 0.0
  %1464 = vadd.xlane.f32.xlu0 %v1463
  %v1465 = vpop.xlane.xlu0 %1464
  %v1466 = vsel %vm145, %v1440, 0.0
  %1467 = vadd.xlane.f32.xlu0 %v1466
  %v1468 = vpop.xlane.xlu0 %1467
  %v1469 = vsel %vm145, %v1441, 0.0
  %1470 = vadd.xlane.f32.xlu0 %v1469
  %v1471 = vpop.xlane.xlu0 %1470
  %v1472 = vsel %vm145, %v1442, 0.0
  %1473 = vadd.xlane.f32.xlu0 %v1472
  %v1474 = vpop.xlane.xlu0 %1473
  %v1475 = vsel %vm145, %v1443, 0.0
  %1476 = vadd.xlane.f32.xlu0 %v1475
  %v1477 = vpop.xlane.xlu0 %1476
  %v1478 = vsel %vm145, %v1444, 0.0
  %1479 = vadd.xlane.f32.xlu0 %v1478
  %v1480 = vpop.xlane.xlu0 %1479
  %v1481 = vsel %vm145, %v1445, 0.0
  %1482 = vadd.xlane.f32.xlu0 %v1481
  %v1483 = vpop.xlane.xlu0 %1482
  %v1484 = vsel %vm145, %v1446, 0.0
  %1485 = vadd.xlane.f32.xlu0 %v1484
  %v1486 = vpop.xlane.xlu0 %1485
  %v1487 = vsel %vm145, %v1447, 0.0
  %1488 = vadd.xlane.f32.xlu0 %v1487
  %v1489 = vpop.xlane.xlu0 %1488
  %v1490 = vsel %vm145, %v1448, 0.0
  %1491 = vadd.xlane.f32.xlu0 %v1490
  %v1492 = vpop.xlane.xlu0 %1491
  %v1493 = vsel %vm145, %v1449, 0.0
  %1494 = vadd.xlane.f32.xlu0 %v1493
  %v1495 = vpop.xlane.xlu0 %1494
  %v1496 = vsel %vm145, %v1450, 0.0
  %1497 = vadd.xlane.f32.xlu0 %v1496
  %v1498 = vpop.xlane.xlu0 %1497
  %v1499 = vadd.f32 %v1319, %v1453
  %v1500 = vadd.f32 %v1321, %v1456
  %v1501 = vadd.f32 %v1323, %v1459
  %v1502 = vadd.f32 %v1325, %v1462
  %v1503 = vadd.f32 %v1327, %v1465
  %v1504 = vadd.f32 %v1329, %v1468
  %v1505 = vadd.f32 %v1331, %v1471
  %v1506 = vadd.f32 %v1333, %v1474
  %v1507 = vadd.f32 %v1335, %v1477
  %v1508 = vadd.f32 %v1337, %v1480
  %v1509 = vadd.f32 %v1339, %v1483
  %v1510 = vadd.f32 %v1341, %v1486
  %v1511 = vadd.f32 %v1343, %v1489
  %v1512 = vadd.f32 %v1345, %v1492
  %v1513 = vadd.f32 %v1347, %v1495
  %v1514 = vadd.f32 %v1349, %v1498
  %s1515 = sld [smem:[#allocation2]]
  %v1516 = vstv %s1515
  %v1517 = vadd.f32 %v1499, %v1516
  %v1518 = vadd.f32 %v1500, %v1516
  %v1519 = vadd.f32 %v1501, %v1516
  %v1520 = vadd.f32 %v1502, %v1516
  %v1521 = vadd.f32 %v1503, %v1516
  %v1522 = vadd.f32 %v1504, %v1516
  %v1523 = vadd.f32 %v1505, %v1516
  %v1524 = vadd.f32 %v1506, %v1516
  %v1525 = vadd.f32 %v1507, %v1516
  %v1526 = vadd.f32 %v1508, %v1516
  %v1527 = vadd.f32 %v1509, %v1516
  %v1528 = vadd.f32 %v1510, %v1516
  %v1529 = vadd.f32 %v1511, %v1516
  %v1530 = vadd.f32 %v1512, %v1516
  %v1531 = vadd.f32 %v1513, %v1516
  %v1532 = vadd.f32 %v1514, %v1516
  %vm1533 = vcmask 7168
  %1534 = vst.msk [vmem:[%s18] sm:$0xff] %vm1533, %v1517
  %1535 = vst.msk [vmem:[%s18 + $0x8] sm:$0xff] %vm1533, %v1518
  %1536 = vst.msk [vmem:[%s18 + $0x10] sm:$0xff] %vm1533, %v1519
  %1537 = vst.msk [vmem:[%s18 + $0x18] sm:$0xff] %vm1533, %v1520
  %1538 = vst.msk [vmem:[%s18 + $0x20] sm:$0xff] %vm1533, %v1521
  %1539 = vst.msk [vmem:[%s18 + $0x28] sm:$0xff] %vm1533, %v1522
  %1540 = vst.msk [vmem:[%s18 + $0x30] sm:$0xff] %vm1533, %v1523
  %1541 = vst.msk [vmem:[%s18 + $0x38] sm:$0xff] %vm1533, %v1524
  %1542 = vst.msk [vmem:[%s18 + $0x40] sm:$0xff] %vm1533, %v1525
  %1543 = vst.msk [vmem:[%s18 + $0x48] sm:$0xff] %vm1533, %v1526
  %1544 = vst.msk [vmem:[%s18 + $0x50] sm:$0xff] %vm1533, %v1527
  %1545 = vst.msk [vmem:[%s18 + $0x58] sm:$0xff] %vm1533, %v1528
  %1546 = vst.msk [vmem:[%s18 + $0x60] sm:$0xff] %vm1533, %v1529
  %1547 = vst.msk [vmem:[%s18 + $0x68] sm:$0xff] %vm1533, %v1530
  %1548 = vst.msk [vmem:[%s18 + $0x70] sm:$0xff] %vm1533, %v1531
  %1549 = vst.msk [vmem:[%s18 + $0x78] sm:$0xff] %vm1533, %v1532
  // Predicated region
  $region74: #{discriminator_forward.1} parent=0 // pred_check
    _
  $region75: #{discriminator_forward.1} parent=0 // pred_check_branch
    %1551 = sbr.rel (0) target = $region77
  $region76: #{discriminator_forward.1} parent=0 // pred_region
    _
  $region77: #{discriminator_forward.1} parent=0 // pred_fallthru
    _
  // Predicated region
  $region78: #{discriminator_forward.1} parent=0 // pred_check
    _
  $region79: #{discriminator_forward.1} parent=0 // pred_check_branch
    %1553 = sbr.rel (0) target = $region81
  $region80: #{discriminator_forward.1} parent=0 // pred_region
    _
  $region81: #{discriminator_forward.1} parent=0 // pred_fallthru
    _

</llo_original>
